<compile_context>
chip_gen: v7x
topology: tpu7x:2x2x1
jax: 0.10.0
libtpu: 0.0.40
codegen_flags: <defaults>
</compile_context>

<pallas_src>
import jax
import jax.numpy as jnp
from jax import lax
from jax.experimental import pallas as pl
from jax.experimental.pallas import tpu as pltpu

NMELS = 32
HIDDEN = 32
PROJ = 16
NUM_LAYERS = 2  # kernel below is written for 2 LSTM layers

BATCH = 2
SEQ = 8

SUBLANE = 8     # batch padding granularity
OUT_PAD = 128   # lane-dense output width (PROJ lives in the low lanes)


def speech_embedder_kernel(x_ref,
                           wih0_ref, whh0_ref, b0_ref,
                           w1_ref, b1_ref,
                           wproj_ref, bproj_ref,
                           out_ref):
    """Full forward pass in one kernel:
       wavefront-interleaved 2-layer LSTM sweep over time -> last h of top layer ->
       projection -> L2-normalize along the feature dim.

       x_ref:    (T*B, F)   time-major, flattened in the wrapper
       wih0_ref: (F, 4H)    whh0_ref: (H, 4H)    b0_ref: (1, 4H)
       w1_ref:   (2H, 4H)   == vstack(Wih1^T, Whh1^T)   b1_ref: (1, 4H)
       wproj_ref:(H, OUT_PAD) zero-padded cols          bproj_ref: (1, OUT_PAD)
       NOTE: g-gate columns (2H:3H) of all LSTM weights/biases are pre-scaled by 2
             so tanh(pre_g) == 2*sigmoid(gates_g) - 1 (single transcendental per cell).
    """
    TB, F = x_ref.shape
    B = out_ref.shape[0]
    T = TB // B
    H = whh0_ref.shape[0]

    whh0 = whh0_ref[...]            # (H, 4H)
    w1 = w1_ref[...]                # (2H, 4H)
    b1 = b1_ref[...]                # (1, 4H)

    def gates_to_hc(gates, c):
        # Single full-vreg sigmoid; g recovered via tanh(x) = 2*sigmoid(2x) - 1
        # (the 2x is baked into the g-gate weight/bias columns in the wrapper).
        sig = jax.nn.sigmoid(gates)
        i = sig[:, 0 * H:1 * H]
        f = sig[:, 1 * H:2 * H]
        g = 2.0 * sig[:, 2 * H:3 * H] - 1.0
        o = sig[:, 3 * H:4 * H]
        c_new = f * c + i * g
        h_new = o * jnp.tanh(c_new)          # narrow (32-lane) tanh
        return h_new, c_new

    # Hoisted layer-0 input projection: one (T*B, F) @ (F, 4H) matmul, off the critical path.
    xproj0 = (jnp.dot(x_ref[...], wih0_ref[...], preferred_element_type=jnp.float32)
              + b0_ref[...])                                    # (T*B, 4H)

    h0 = jnp.zeros((B, H), jnp.float32)
    c0 = jnp.zeros((B, H), jnp.float32)
    h1 = jnp.zeros((B, H), jnp.float32)
    c1 = jnp.zeros((B, H), jnp.float32)

    # Static unroll (T fixed, small). Wavefront: layer-1 step t and layer-0 step t+1 are
    # independent, giving the scheduler two overlapping serial chains.
    for t in range(T):
        # ---- layer 0, step t (only h0 @ whh0 on its serial chain) ----
        gates0 = xproj0[t * B:(t + 1) * B, :] + jnp.dot(
            h0, whh0, preferred_element_type=jnp.float32)
        h0, c0 = gates_to_hc(gates0, c0)
        # ---- layer 1, step t (one K=2H matmul over [h0_t, h1_{t-1}]) ----
        gates1 = jnp.dot(jnp.concatenate([h0, h1], axis=1), w1,
                         preferred_element_type=jnp.float32) + b1
        h1, c1 = gates_to_hc(gates1, c1)

    # -------- Projection (lane-dense, padded to 128 cols) + L2-normalize --------
    # Padded weight/bias columns are zero, so the sum of squares over the full row
    # equals the norm over the real PROJ features.
    y = jnp.dot(h1, wproj_ref[...], preferred_element_type=jnp.float32) + bproj_ref[...]
    sumsq = jnp.sum(y * y, axis=1, keepdims=True)
    out_ref[...] = y * lax.rsqrt(sumsq + 1e-12)


def init_params(key):
    """Deterministic init matching the module's __init__: xavier_normal_ weights,
    zero LSTM biases, deterministic random linear params."""
    def xavier_normal(k, shape):
        fan_out, fan_in = shape
        std = (2.0 / (fan_in + fan_out)) ** 0.5
        return std * jax.random.normal(k, shape, jnp.float32)

    ks = jax.random.split(key, 8)
    params = {
        # PyTorch LSTM parameter shapes (gate order i, f, g, o)
        "w_ih0": xavier_normal(ks[0], (4 * HIDDEN, NMELS)),
        "w_hh0": xavier_normal(ks[1], (4 * HIDDEN, HIDDEN)),
        "b_ih0": jnp.zeros((4 * HIDDEN,), jnp.float32),
        "b_hh0": jnp.zeros((4 * HIDDEN,), jnp.float32),
        "w_ih1": xavier_normal(ks[2], (4 * HIDDEN, HIDDEN)),
        "w_hh1": xavier_normal(ks[3], (4 * HIDDEN, HIDDEN)),
        "b_ih1": jnp.zeros((4 * HIDDEN,), jnp.float32),
        "b_hh1": jnp.zeros((4 * HIDDEN,), jnp.float32),
        # nn.Linear(hidden, proj)
        "w_proj": xavier_normal(ks[4], (PROJ, HIDDEN)),
        "b_proj": 0.1 * jax.random.normal(ks[5], (PROJ,), jnp.float32),
    }
    return params


def speech_embedder_forward(x, params):
    """x: (B, T, nmels) like PyTorch batch_first LSTM input. Returns (B, PROJ)."""
    x = x.astype(jnp.float32)
    B, T, F = x.shape
    H = HIDDEN

    # Pad batch to the sublane granularity so every tile is a full (8, lanes) slab.
    B_pad = max(SUBLANE, ((B + SUBLANE - 1) // SUBLANE) * SUBLANE)
    x_p = jnp.pad(x, ((0, B_pad - B), (0, 0), (0, 0)))
    # Time-major + flatten in the wrapper (free layout plumbing; no in-kernel reshape).
    x2d = jnp.transpose(x_p, (1, 0, 2)).reshape(T * B_pad, F)   # (T*B_pad, F)

    # tanh-via-sigmoid trick: scale the g-gate columns (2H:3H) of all LSTM weights
    # and folded biases by 2 so the kernel needs a single sigmoid per cell.
    def scale_g_cols(w):
        return w.at[..., 2 * H:3 * H].multiply(2.0)

    wih0_t = scale_g_cols(params["w_ih0"].T)                                   # (F, 4H)
    whh0_t = scale_g_cols(params["w_hh0"].T)                                   # (H, 4H)
    b0 = scale_g_cols((params["b_ih0"] + params["b_hh0"]).reshape(1, -1))      # (1, 4H)
    w1cat = scale_g_cols(jnp.concatenate([params["w_ih1"].T,
                                          params["w_hh1"].T], axis=0))         # (2H, 4H)
    b1 = scale_g_cols((params["b_ih1"] + params["b_hh1"]).reshape(1, -1))      # (1, 4H)

    # Lane-dense projection: pad (H, PROJ) -> (H, 128) with zero columns so the
    # final store is a full unmasked vreg and the L2 norm is unchanged.
    wproj_t = jnp.zeros((H, OUT_PAD), jnp.float32).at[:, :PROJ].set(params["w_proj"].T)
    bproj = jnp.zeros((1, OUT_PAD), jnp.float32).at[0, :PROJ].set(params["b_proj"])

    vmem = pl.BlockSpec(memory_space=pltpu.MemorySpace.VMEM)
    out_padded = pl.pallas_call(
        speech_embedder_kernel,
        out_shape=jax.ShapeDtypeStruct((B_pad, OUT_PAD), jnp.float32),
        in_specs=[vmem] * 8,
        out_specs=vmem,
    )(x2d, wih0_t, whh0_t, b0, w1cat, b1, wproj_t, bproj)

    return out_padded[:B, :PROJ]


def speech_embedder_reference(x, params):
    """Pure-JAX reference mirroring PyTorch semantics (for a sanity check)."""
    x = x.astype(jnp.float32)
    B, T, _ = x.shape
    H = HIDDEN

    def cell(x_t, h, c, w_ih, w_hh, b_ih, b_hh):
        g = x_t @ w_ih.T + b_ih + h @ w_hh.T + b_hh
        i = jax.nn.sigmoid(g[:, 0:H])
        f = jax.nn.sigmoid(g[:, H:2 * H])
        gg = jnp.tanh(g[:, 2 * H:3 * H])
        o = jax.nn.sigmoid(g[:, 3 * H:4 * H])
        c = f * c + i * gg
        return o * jnp.tanh(c), c

    h0 = c0 = h1 = c1 = jnp.zeros((B, H), jnp.float32)
    for t in range(T):
        h0, c0 = cell(x[:, t], h0, c0, params["w_ih0"], params["w_hh0"],
                      params["b_ih0"], params["b_hh0"])
        h1, c1 = cell(h0, h1, c1, params["w_ih1"], params["w_hh1"],
                      params["b_ih1"], params["b_hh1"])
    y = h1 @ params["w_proj"].T + params["b_proj"]
    return y / jnp.linalg.norm(y, axis=1, keepdims=True)


if __name__ == "__main__":
    key = jax.random.PRNGKey(0)
    k_param, k_x = jax.random.split(key)
    params = init_params(k_param)
    x = jax.random.normal(k_x, (BATCH, SEQ, NMELS), jnp.float32)

    out = speech_embedder_forward(x, params)
    out = jax.block_until_ready(out)

    ref = speech_embedder_reference(x, params)
    assert out.shape == (BATCH, PROJ)
    assert jnp.allclose(out, ref, atol=1e-3, rtol=1e-3)

    print("KERNEL_OK")
</pallas_src>

<mosaic_0001>
module attributes {stable_mosaic.version = 11 : i64} {
  func.func @speech_embedder_kernel(%arg0: memref<64x32xf32, #tpu.memory_space<vmem>>, %arg1: memref<32x128xf32, #tpu.memory_space<vmem>>, %arg2: memref<32x128xf32, #tpu.memory_space<vmem>>, %arg3: memref<1x128xf32, #tpu.memory_space<vmem>>, %arg4: memref<64x128xf32, #tpu.memory_space<vmem>>, %arg5: memref<1x128xf32, #tpu.memory_space<vmem>>, %arg6: memref<32x128xf32, #tpu.memory_space<vmem>>, %arg7: memref<1x128xf32, #tpu.memory_space<vmem>>, %arg8: memref<8x128xf32, #tpu.memory_space<vmem>>) attributes {dimension_semantics = [], scalar_prefetch = 0 : i64, scratch_operands = 0 : i64, tpu.core_type = #tpu.core_type<tc>} {
    %c0 = arith.constant 0 : index
    %c0_0 = arith.constant 0 : index
    %0 = vector.load %arg2[%c0, %c0_0] : memref<32x128xf32, #tpu.memory_space<vmem>>, vector<32x128xf32>
    %c0_1 = arith.constant 0 : index
    %c0_2 = arith.constant 0 : index
    %1 = vector.load %arg4[%c0_1, %c0_2] : memref<64x128xf32, #tpu.memory_space<vmem>>, vector<64x128xf32>
    %c0_3 = arith.constant 0 : index
    %c0_4 = arith.constant 0 : index
    %2 = vector.load %arg5[%c0_3, %c0_4] : memref<1x128xf32, #tpu.memory_space<vmem>>, vector<1x128xf32>
    %c0_5 = arith.constant 0 : index
    %c0_6 = arith.constant 0 : index
    %3 = vector.load %arg0[%c0_5, %c0_6] : memref<64x32xf32, #tpu.memory_space<vmem>>, vector<64x32xf32>
    %c0_7 = arith.constant 0 : index
    %c0_8 = arith.constant 0 : index
    %4 = vector.load %arg1[%c0_7, %c0_8] : memref<32x128xf32, #tpu.memory_space<vmem>>, vector<32x128xf32>
    %cst = arith.constant dense<0.000000e+00> : vector<64x128xf32>
    %5 = tpu.matmul %3, %4, %cst {dimension_numbers = #tpu.dot_dimension_numbers<[1], [0], [0], [1], [0, 0, 1, 1], [], []>} : vector<64x32xf32>, vector<32x128xf32>, vector<64x128xf32> -> vector<64x128xf32>
    %c0_9 = arith.constant 0 : index
    %c0_10 = arith.constant 0 : index
    %6 = vector.load %arg3[%c0_9, %c0_10] : memref<1x128xf32, #tpu.memory_space<vmem>>, vector<1x128xf32>
    %7 = vector.broadcast %6 : vector<1x128xf32> to vector<64x128xf32>
    %8 = arith.addf %5, %7 : vector<64x128xf32>
    %cst_11 = arith.constant 0.000000e+00 : f32
    %9 = vector.broadcast %cst_11 : f32 to vector<8x32xf32>
    %cst_12 = arith.constant 0.000000e+00 : f32
    %10 = vector.broadcast %cst_12 : f32 to vector<8x32xf32>
    %cst_13 = arith.constant 0.000000e+00 : f32
    %11 = vector.broadcast %cst_13 : f32 to vector<8x32xf32>
    %cst_14 = arith.constant 0.000000e+00 : f32
    %12 = vector.broadcast %cst_14 : f32 to vector<8x32xf32>
    %13 = vector.extract_strided_slice %8 {offsets = [0, 0], sizes = [8, 128], strides = [1, 1]} : vector<64x128xf32> to vector<8x128xf32>
    %cst_15 = arith.constant dense<0.000000e+00> : vector<8x128xf32>
    %14 = tpu.matmul %9, %0, %cst_15 {dimension_numbers = #tpu.dot_dimension_numbers<[1], [0], [0], [1], [0, 0, 1, 1], [], []>} : vector<8x32xf32>, vector<32x128xf32>, vector<8x128xf32> -> vector<8x128xf32>
    %15 = arith.addf %13, %14 : vector<8x128xf32>
    %16 = arith.negf %15 : vector<8x128xf32>
    %17 = math.exp %16 : vector<8x128xf32>
    %cst_16 = arith.constant 1.000000e+00 : f32
    %18 = vector.broadcast %cst_16 : f32 to vector<8x128xf32>
    %19 = arith.addf %18, %17 : vector<8x128xf32>
    %20 = arith.divf %18, %19 : vector<8x128xf32>
    %21 = vector.extract_strided_slice %20 {offsets = [0, 0], sizes = [8, 32], strides = [1, 1]} : vector<8x128xf32> to vector<8x32xf32>
    %22 = vector.extract_strided_slice %20 {offsets = [0, 32], sizes = [8, 32], strides = [1, 1]} : vector<8x128xf32> to vector<8x32xf32>
    %23 = vector.extract_strided_slice %20 {offsets = [0, 64], sizes = [8, 32], strides = [1, 1]} : vector<8x128xf32> to vector<8x32xf32>
    %cst_17 = arith.constant 2.000000e+00 : f32
    %24 = vector.broadcast %cst_17 : f32 to vector<8x32xf32>
    %25 = arith.mulf %24, %23 : vector<8x32xf32>
    %cst_18 = arith.constant 1.000000e+00 : f32
    %26 = vector.broadcast %cst_18 : f32 to vector<8x32xf32>
    %27 = arith.subf %25, %26 : vector<8x32xf32>
    %28 = vector.extract_strided_slice %20 {offsets = [0, 96], sizes = [8, 32], strides = [1, 1]} : vector<8x128xf32> to vector<8x32xf32>
    %29 = arith.mulf %22, %10 : vector<8x32xf32>
    %30 = arith.mulf %21, %27 : vector<8x32xf32>
    %31 = arith.addf %29, %30 : vector<8x32xf32>
    %32 = math.tanh %31 : vector<8x32xf32>
    %33 = arith.mulf %28, %32 : vector<8x32xf32>
    %34 = tpu.concatenate %33, %11 in 1 : vector<8x32xf32>, vector<8x32xf32> -> vector<8x64xf32>
    %cst_19 = arith.constant dense<0.000000e+00> : vector<8x128xf32>
    %35 = tpu.matmul %34, %1, %cst_19 {dimension_numbers = #tpu.dot_dimension_numbers<[1], [0], [0], [1], [0, 0, 1, 1], [], []>} : vector<8x64xf32>, vector<64x128xf32>, vector<8x128xf32> -> vector<8x128xf32>
    %36 = vector.broadcast %2 : vector<1x128xf32> to vector<8x128xf32>
    %37 = arith.addf %35, %36 : vector<8x128xf32>
    %38 = arith.negf %37 : vector<8x128xf32>
    %39 = math.exp %38 : vector<8x128xf32>
    %cst_20 = arith.constant 1.000000e+00 : f32
    %40 = vector.broadcast %cst_20 : f32 to vector<8x128xf32>
    %41 = arith.addf %40, %39 : vector<8x128xf32>
    %42 = arith.divf %40, %41 : vector<8x128xf32>
    %43 = vector.extract_strided_slice %42 {offsets = [0, 0], sizes = [8, 32], strides = [1, 1]} : vector<8x128xf32> to vector<8x32xf32>
    %44 = vector.extract_strided_slice %42 {offsets = [0, 32], sizes = [8, 32], strides = [1, 1]} : vector<8x128xf32> to vector<8x32xf32>
    %45 = vector.extract_strided_slice %42 {offsets = [0, 64], sizes = [8, 32], strides = [1, 1]} : vector<8x128xf32> to vector<8x32xf32>
    %cst_21 = arith.constant 2.000000e+00 : f32
    %46 = vector.broadcast %cst_21 : f32 to vector<8x32xf32>
    %47 = arith.mulf %46, %45 : vector<8x32xf32>
    %cst_22 = arith.constant 1.000000e+00 : f32
    %48 = vector.broadcast %cst_22 : f32 to vector<8x32xf32>
    %49 = arith.subf %47, %48 : vector<8x32xf32>
    %50 = vector.extract_strided_slice %42 {offsets = [0, 96], sizes = [8, 32], strides = [1, 1]} : vector<8x128xf32> to vector<8x32xf32>
    %51 = arith.mulf %44, %12 : vector<8x32xf32>
    %52 = arith.mulf %43, %49 : vector<8x32xf32>
    %53 = arith.addf %51, %52 : vector<8x32xf32>
    %54 = math.tanh %53 : vector<8x32xf32>
    %55 = arith.mulf %50, %54 : vector<8x32xf32>
    %56 = vector.extract_strided_slice %8 {offsets = [8, 0], sizes = [8, 128], strides = [1, 1]} : vector<64x128xf32> to vector<8x128xf32>
    %cst_23 = arith.constant dense<0.000000e+00> : vector<8x128xf32>
    %57 = tpu.matmul %33, %0, %cst_23 {dimension_numbers = #tpu.dot_dimension_numbers<[1], [0], [0], [1], [0, 0, 1, 1], [], []>} : vector<8x32xf32>, vector<32x128xf32>, vector<8x128xf32> -> vector<8x128xf32>
    %58 = arith.addf %56, %57 : vector<8x128xf32>
    %59 = arith.negf %58 : vector<8x128xf32>
    %60 = math.exp %59 : vector<8x128xf32>
    %cst_24 = arith.constant 1.000000e+00 : f32
    %61 = vector.broadcast %cst_24 : f32 to vector<8x128xf32>
    %62 = arith.addf %61, %60 : vector<8x128xf32>
    %63 = arith.divf %61, %62 : vector<8x128xf32>
    %64 = vector.extract_strided_slice %63 {offsets = [0, 0], sizes = [8, 32], strides = [1, 1]} : vector<8x128xf32> to vector<8x32xf32>
    %65 = vector.extract_strided_slice %63 {offsets = [0, 32], sizes = [8, 32], strides = [1, 1]} : vector<8x128xf32> to vector<8x32xf32>
    %66 = vector.extract_strided_slice %63 {offsets = [0, 64], sizes = [8, 32], strides = [1, 1]} : vector<8x128xf32> to vector<8x32xf32>
    %cst_25 = arith.constant 2.000000e+00 : f32
    %67 = vector.broadcast %cst_25 : f32 to vector<8x32xf32>
    %68 = arith.mulf %67, %66 : vector<8x32xf32>
    %cst_26 = arith.constant 1.000000e+00 : f32
    %69 = vector.broadcast %cst_26 : f32 to vector<8x32xf32>
    %70 = arith.subf %68, %69 : vector<8x32xf32>
    %71 = vector.extract_strided_slice %63 {offsets = [0, 96], sizes = [8, 32], strides = [1, 1]} : vector<8x128xf32> to vector<8x32xf32>
    %72 = arith.mulf %65, %31 : vector<8x32xf32>
    %73 = arith.mulf %64, %70 : vector<8x32xf32>
    %74 = arith.addf %72, %73 : vector<8x32xf32>
    %75 = math.tanh %74 : vector<8x32xf32>
    %76 = arith.mulf %71, %75 : vector<8x32xf32>
    %77 = tpu.concatenate %76, %55 in 1 : vector<8x32xf32>, vector<8x32xf32> -> vector<8x64xf32>
    %cst_27 = arith.constant dense<0.000000e+00> : vector<8x128xf32>
    %78 = tpu.matmul %77, %1, %cst_27 {dimension_numbers = #tpu.dot_dimension_numbers<[1], [0], [0], [1], [0, 0, 1, 1], [], []>} : vector<8x64xf32>, vector<64x128xf32>, vector<8x128xf32> -> vector<8x128xf32>
    %79 = vector.broadcast %2 : vector<1x128xf32> to vector<8x128xf32>
    %80 = arith.addf %78, %79 : vector<8x128xf32>
    %81 = arith.negf %80 : vector<8x128xf32>
    %82 = math.exp %81 : vector<8x128xf32>
    %cst_28 = arith.constant 1.000000e+00 : f32
    %83 = vector.broadcast %cst_28 : f32 to vector<8x128xf32>
    %84 = arith.addf %83, %82 : vector<8x128xf32>
    %85 = arith.divf %83, %84 : vector<8x128xf32>
    %86 = vector.extract_strided_slice %85 {offsets = [0, 0], sizes = [8, 32], strides = [1, 1]} : vector<8x128xf32> to vector<8x32xf32>
    %87 = vector.extract_strided_slice %85 {offsets = [0, 32], sizes = [8, 32], strides = [1, 1]} : vector<8x128xf32> to vector<8x32xf32>
    %88 = vector.extract_strided_slice %85 {offsets = [0, 64], sizes = [8, 32], strides = [1, 1]} : vector<8x128xf32> to vector<8x32xf32>
    %cst_29 = arith.constant 2.000000e+00 : f32
    %89 = vector.broadcast %cst_29 : f32 to vector<8x32xf32>
    %90 = arith.mulf %89, %88 : vector<8x32xf32>
    %cst_30 = arith.constant 1.000000e+00 : f32
    %91 = vector.broadcast %cst_30 : f32 to vector<8x32xf32>
    %92 = arith.subf %90, %91 : vector<8x32xf32>
    %93 = vector.extract_strided_slice %85 {offsets = [0, 96], sizes = [8, 32], strides = [1, 1]} : vector<8x128xf32> to vector<8x32xf32>
    %94 = arith.mulf %87, %53 : vector<8x32xf32>
    %95 = arith.mulf %86, %92 : vector<8x32xf32>
    %96 = arith.addf %94, %95 : vector<8x32xf32>
    %97 = math.tanh %96 : vector<8x32xf32>
    %98 = arith.mulf %93, %97 : vector<8x32xf32>
    %99 = vector.extract_strided_slice %8 {offsets = [16, 0], sizes = [8, 128], strides = [1, 1]} : vector<64x128xf32> to vector<8x128xf32>
    %cst_31 = arith.constant dense<0.000000e+00> : vector<8x128xf32>
    %100 = tpu.matmul %76, %0, %cst_31 {dimension_numbers = #tpu.dot_dimension_numbers<[1], [0], [0], [1], [0, 0, 1, 1], [], []>} : vector<8x32xf32>, vector<32x128xf32>, vector<8x128xf32> -> vector<8x128xf32>
    %101 = arith.addf %99, %100 : vector<8x128xf32>
    %102 = arith.negf %101 : vector<8x128xf32>
    %103 = math.exp %102 : vector<8x128xf32>
    %cst_32 = arith.constant 1.000000e+00 : f32
    %104 = vector.broadcast %cst_32 : f32 to vector<8x128xf32>
    %105 = arith.addf %104, %103 : vector<8x128xf32>
    %106 = arith.divf %104, %105 : vector<8x128xf32>
    %107 = vector.extract_strided_slice %106 {offsets = [0, 0], sizes = [8, 32], strides = [1, 1]} : vector<8x128xf32> to vector<8x32xf32>
    %108 = vector.extract_strided_slice %106 {offsets = [0, 32], sizes = [8, 32], strides = [1, 1]} : vector<8x128xf32> to vector<8x32xf32>
    %109 = vector.extract_strided_slice %106 {offsets = [0, 64], sizes = [8, 32], strides = [1, 1]} : vector<8x128xf32> to vector<8x32xf32>
    %cst_33 = arith.constant 2.000000e+00 : f32
    %110 = vector.broadcast %cst_33 : f32 to vector<8x32xf32>
    %111 = arith.mulf %110, %109 : vector<8x32xf32>
    %cst_34 = arith.constant 1.000000e+00 : f32
    %112 = vector.broadcast %cst_34 : f32 to vector<8x32xf32>
    %113 = arith.subf %111, %112 : vector<8x32xf32>
    %114 = vector.extract_strided_slice %106 {offsets = [0, 96], sizes = [8, 32], strides = [1, 1]} : vector<8x128xf32> to vector<8x32xf32>
    %115 = arith.mulf %108, %74 : vector<8x32xf32>
    %116 = arith.mulf %107, %113 : vector<8x32xf32>
    %117 = arith.addf %115, %116 : vector<8x32xf32>
    %118 = math.tanh %117 : vector<8x32xf32>
    %119 = arith.mulf %114, %118 : vector<8x32xf32>
    %120 = tpu.concatenate %119, %98 in 1 : vector<8x32xf32>, vector<8x32xf32> -> vector<8x64xf32>
    %cst_35 = arith.constant dense<0.000000e+00> : vector<8x128xf32>
    %121 = tpu.matmul %120, %1, %cst_35 {dimension_numbers = #tpu.dot_dimension_numbers<[1], [0], [0], [1], [0, 0, 1, 1], [], []>} : vector<8x64xf32>, vector<64x128xf32>, vector<8x128xf32> -> vector<8x128xf32>
    %122 = vector.broadcast %2 : vector<1x128xf32> to vector<8x128xf32>
    %123 = arith.addf %121, %122 : vector<8x128xf32>
    %124 = arith.negf %123 : vector<8x128xf32>
    %125 = math.exp %124 : vector<8x128xf32>
    %cst_36 = arith.constant 1.000000e+00 : f32
    %126 = vector.broadcast %cst_36 : f32 to vector<8x128xf32>
    %127 = arith.addf %126, %125 : vector<8x128xf32>
    %128 = arith.divf %126, %127 : vector<8x128xf32>
    %129 = vector.extract_strided_slice %128 {offsets = [0, 0], sizes = [8, 32], strides = [1, 1]} : vector<8x128xf32> to vector<8x32xf32>
    %130 = vector.extract_strided_slice %128 {offsets = [0, 32], sizes = [8, 32], strides = [1, 1]} : vector<8x128xf32> to vector<8x32xf32>
    %131 = vector.extract_strided_slice %128 {offsets = [0, 64], sizes = [8, 32], strides = [1, 1]} : vector<8x128xf32> to vector<8x32xf32>
    %cst_37 = arith.constant 2.000000e+00 : f32
    %132 = vector.broadcast %cst_37 : f32 to vector<8x32xf32>
    %133 = arith.mulf %132, %131 : vector<8x32xf32>
    %cst_38 = arith.constant 1.000000e+00 : f32
    %134 = vector.broadcast %cst_38 : f32 to vector<8x32xf32>
    %135 = arith.subf %133, %134 : vector<8x32xf32>
    %136 = vector.extract_strided_slice %128 {offsets = [0, 96], sizes = [8, 32], strides = [1, 1]} : vector<8x128xf32> to vector<8x32xf32>
    %137 = arith.mulf %130, %96 : vector<8x32xf32>
    %138 = arith.mulf %129, %135 : vector<8x32xf32>
    %139 = arith.addf %137, %138 : vector<8x32xf32>
    %140 = math.tanh %139 : vector<8x32xf32>
    %141 = arith.mulf %136, %140 : vector<8x32xf32>
    %142 = vector.extract_strided_slice %8 {offsets = [24, 0], sizes = [8, 128], strides = [1, 1]} : vector<64x128xf32> to vector<8x128xf32>
    %cst_39 = arith.constant dense<0.000000e+00> : vector<8x128xf32>
    %143 = tpu.matmul %119, %0, %cst_39 {dimension_numbers = #tpu.dot_dimension_numbers<[1], [0], [0], [1], [0, 0, 1, 1], [], []>} : vector<8x32xf32>, vector<32x128xf32>, vector<8x128xf32> -> vector<8x128xf32>
    %144 = arith.addf %142, %143 : vector<8x128xf32>
    %145 = arith.negf %144 : vector<8x128xf32>
    %146 = math.exp %145 : vector<8x128xf32>
    %cst_40 = arith.constant 1.000000e+00 : f32
    %147 = vector.broadcast %cst_40 : f32 to vector<8x128xf32>
    %148 = arith.addf %147, %146 : vector<8x128xf32>
    %149 = arith.divf %147, %148 : vector<8x128xf32>
    %150 = vector.extract_strided_slice %149 {offsets = [0, 0], sizes = [8, 32], strides = [1, 1]} : vector<8x128xf32> to vector<8x32xf32>
    %151 = vector.extract_strided_slice %149 {offsets = [0, 32], sizes = [8, 32], strides = [1, 1]} : vector<8x128xf32> to vector<8x32xf32>
    %152 = vector.extract_strided_slice %149 {offsets = [0, 64], sizes = [8, 32], strides = [1, 1]} : vector<8x128xf32> to vector<8x32xf32>
    %cst_41 = arith.constant 2.000000e+00 : f32
    %153 = vector.broadcast %cst_41 : f32 to vector<8x32xf32>
    %154 = arith.mulf %153, %152 : vector<8x32xf32>
    %cst_42 = arith.constant 1.000000e+00 : f32
    %155 = vector.broadcast %cst_42 : f32 to vector<8x32xf32>
    %156 = arith.subf %154, %155 : vector<8x32xf32>
    %157 = vector.extract_strided_slice %149 {offsets = [0, 96], sizes = [8, 32], strides = [1, 1]} : vector<8x128xf32> to vector<8x32xf32>
    %158 = arith.mulf %151, %117 : vector<8x32xf32>
    %159 = arith.mulf %150, %156 : vector<8x32xf32>
    %160 = arith.addf %158, %159 : vector<8x32xf32>
    %161 = math.tanh %160 : vector<8x32xf32>
    %162 = arith.mulf %157, %161 : vector<8x32xf32>
    %163 = tpu.concatenate %162, %141 in 1 : vector<8x32xf32>, vector<8x32xf32> -> vector<8x64xf32>
    %cst_43 = arith.constant dense<0.000000e+00> : vector<8x128xf32>
    %164 = tpu.matmul %163, %1, %cst_43 {dimension_numbers = #tpu.dot_dimension_numbers<[1], [0], [0], [1], [0, 0, 1, 1], [], []>} : vector<8x64xf32>, vector<64x128xf32>, vector<8x128xf32> -> vector<8x128xf32>
    %165 = vector.broadcast %2 : vector<1x128xf32> to vector<8x128xf32>
    %166 = arith.addf %164, %165 : vector<8x128xf32>
    %167 = arith.negf %166 : vector<8x128xf32>
    %168 = math.exp %167 : vector<8x128xf32>
    %cst_44 = arith.constant 1.000000e+00 : f32
    %169 = vector.broadcast %cst_44 : f32 to vector<8x128xf32>
    %170 = arith.addf %169, %168 : vector<8x128xf32>
    %171 = arith.divf %169, %170 : vector<8x128xf32>
    %172 = vector.extract_strided_slice %171 {offsets = [0, 0], sizes = [8, 32], strides = [1, 1]} : vector<8x128xf32> to vector<8x32xf32>
    %173 = vector.extract_strided_slice %171 {offsets = [0, 32], sizes = [8, 32], strides = [1, 1]} : vector<8x128xf32> to vector<8x32xf32>
    %174 = vector.extract_strided_slice %171 {offsets = [0, 64], sizes = [8, 32], strides = [1, 1]} : vector<8x128xf32> to vector<8x32xf32>
    %cst_45 = arith.constant 2.000000e+00 : f32
    %175 = vector.broadcast %cst_45 : f32 to vector<8x32xf32>
    %176 = arith.mulf %175, %174 : vector<8x32xf32>
    %cst_46 = arith.constant 1.000000e+00 : f32
    %177 = vector.broadcast %cst_46 : f32 to vector<8x32xf32>
    %178 = arith.subf %176, %177 : vector<8x32xf32>
    %179 = vector.extract_strided_slice %171 {offsets = [0, 96], sizes = [8, 32], strides = [1, 1]} : vector<8x128xf32> to vector<8x32xf32>
    %180 = arith.mulf %173, %139 : vector<8x32xf32>
    %181 = arith.mulf %172, %178 : vector<8x32xf32>
    %182 = arith.addf %180, %181 : vector<8x32xf32>
    %183 = math.tanh %182 : vector<8x32xf32>
    %184 = arith.mulf %179, %183 : vector<8x32xf32>
    %185 = vector.extract_strided_slice %8 {offsets = [32, 0], sizes = [8, 128], strides = [1, 1]} : vector<64x128xf32> to vector<8x128xf32>
    %cst_47 = arith.constant dense<0.000000e+00> : vector<8x128xf32>
    %186 = tpu.matmul %162, %0, %cst_47 {dimension_numbers = #tpu.dot_dimension_numbers<[1], [0], [0], [1], [0, 0, 1, 1], [], []>} : vector<8x32xf32>, vector<32x128xf32>, vector<8x128xf32> -> vector<8x128xf32>
    %187 = arith.addf %185, %186 : vector<8x128xf32>
    %188 = arith.negf %187 : vector<8x128xf32>
    %189 = math.exp %188 : vector<8x128xf32>
    %cst_48 = arith.constant 1.000000e+00 : f32
    %190 = vector.broadcast %cst_48 : f32 to vector<8x128xf32>
    %191 = arith.addf %190, %189 : vector<8x128xf32>
    %192 = arith.divf %190, %191 : vector<8x128xf32>
    %193 = vector.extract_strided_slice %192 {offsets = [0, 0], sizes = [8, 32], strides = [1, 1]} : vector<8x128xf32> to vector<8x32xf32>
    %194 = vector.extract_strided_slice %192 {offsets = [0, 32], sizes = [8, 32], strides = [1, 1]} : vector<8x128xf32> to vector<8x32xf32>
    %195 = vector.extract_strided_slice %192 {offsets = [0, 64], sizes = [8, 32], strides = [1, 1]} : vector<8x128xf32> to vector<8x32xf32>
    %cst_49 = arith.constant 2.000000e+00 : f32
    %196 = vector.broadcast %cst_49 : f32 to vector<8x32xf32>
    %197 = arith.mulf %196, %195 : vector<8x32xf32>
    %cst_50 = arith.constant 1.000000e+00 : f32
    %198 = vector.broadcast %cst_50 : f32 to vector<8x32xf32>
    %199 = arith.subf %197, %198 : vector<8x32xf32>
    %200 = vector.extract_strided_slice %192 {offsets = [0, 96], sizes = [8, 32], strides = [1, 1]} : vector<8x128xf32> to vector<8x32xf32>
    %201 = arith.mulf %194, %160 : vector<8x32xf32>
    %202 = arith.mulf %193, %199 : vector<8x32xf32>
    %203 = arith.addf %201, %202 : vector<8x32xf32>
    %204 = math.tanh %203 : vector<8x32xf32>
    %205 = arith.mulf %200, %204 : vector<8x32xf32>
    %206 = tpu.concatenate %205, %184 in 1 : vector<8x32xf32>, vector<8x32xf32> -> vector<8x64xf32>
    %cst_51 = arith.constant dense<0.000000e+00> : vector<8x128xf32>
    %207 = tpu.matmul %206, %1, %cst_51 {dimension_numbers = #tpu.dot_dimension_numbers<[1], [0], [0], [1], [0, 0, 1, 1], [], []>} : vector<8x64xf32>, vector<64x128xf32>, vector<8x128xf32> -> vector<8x128xf32>
    %208 = vector.broadcast %2 : vector<1x128xf32> to vector<8x128xf32>
    %209 = arith.addf %207, %208 : vector<8x128xf32>
    %210 = arith.negf %209 : vector<8x128xf32>
    %211 = math.exp %210 : vector<8x128xf32>
    %cst_52 = arith.constant 1.000000e+00 : f32
    %212 = vector.broadcast %cst_52 : f32 to vector<8x128xf32>
    %213 = arith.addf %212, %211 : vector<8x128xf32>
    %214 = arith.divf %212, %213 : vector<8x128xf32>
    %215 = vector.extract_strided_slice %214 {offsets = [0, 0], sizes = [8, 32], strides = [1, 1]} : vector<8x128xf32> to vector<8x32xf32>
    %216 = vector.extract_strided_slice %214 {offsets = [0, 32], sizes = [8, 32], strides = [1, 1]} : vector<8x128xf32> to vector<8x32xf32>
    %217 = vector.extract_strided_slice %214 {offsets = [0, 64], sizes = [8, 32], strides = [1, 1]} : vector<8x128xf32> to vector<8x32xf32>
    %cst_53 = arith.constant 2.000000e+00 : f32
    %218 = vector.broadcast %cst_53 : f32 to vector<8x32xf32>
    %219 = arith.mulf %218, %217 : vector<8x32xf32>
    %cst_54 = arith.constant 1.000000e+00 : f32
    %220 = vector.broadcast %cst_54 : f32 to vector<8x32xf32>
    %221 = arith.subf %219, %220 : vector<8x32xf32>
    %222 = vector.extract_strided_slice %214 {offsets = [0, 96], sizes = [8, 32], strides = [1, 1]} : vector<8x128xf32> to vector<8x32xf32>
    %223 = arith.mulf %216, %182 : vector<8x32xf32>
    %224 = arith.mulf %215, %221 : vector<8x32xf32>
    %225 = arith.addf %223, %224 : vector<8x32xf32>
    %226 = math.tanh %225 : vector<8x32xf32>
    %227 = arith.mulf %222, %226 : vector<8x32xf32>
    %228 = vector.extract_strided_slice %8 {offsets = [40, 0], sizes = [8, 128], strides = [1, 1]} : vector<64x128xf32> to vector<8x128xf32>
    %cst_55 = arith.constant dense<0.000000e+00> : vector<8x128xf32>
    %229 = tpu.matmul %205, %0, %cst_55 {dimension_numbers = #tpu.dot_dimension_numbers<[1], [0], [0], [1], [0, 0, 1, 1], [], []>} : vector<8x32xf32>, vector<32x128xf32>, vector<8x128xf32> -> vector<8x128xf32>
    %230 = arith.addf %228, %229 : vector<8x128xf32>
    %231 = arith.negf %230 : vector<8x128xf32>
    %232 = math.exp %231 : vector<8x128xf32>
    %cst_56 = arith.constant 1.000000e+00 : f32
    %233 = vector.broadcast %cst_56 : f32 to vector<8x128xf32>
    %234 = arith.addf %233, %232 : vector<8x128xf32>
    %235 = arith.divf %233, %234 : vector<8x128xf32>
    %236 = vector.extract_strided_slice %235 {offsets = [0, 0], sizes = [8, 32], strides = [1, 1]} : vector<8x128xf32> to vector<8x32xf32>
    %237 = vector.extract_strided_slice %235 {offsets = [0, 32], sizes = [8, 32], strides = [1, 1]} : vector<8x128xf32> to vector<8x32xf32>
    %238 = vector.extract_strided_slice %235 {offsets = [0, 64], sizes = [8, 32], strides = [1, 1]} : vector<8x128xf32> to vector<8x32xf32>
    %cst_57 = arith.constant 2.000000e+00 : f32
    %239 = vector.broadcast %cst_57 : f32 to vector<8x32xf32>
    %240 = arith.mulf %239, %238 : vector<8x32xf32>
    %cst_58 = arith.constant 1.000000e+00 : f32
    %241 = vector.broadcast %cst_58 : f32 to vector<8x32xf32>
    %242 = arith.subf %240, %241 : vector<8x32xf32>
    %243 = vector.extract_strided_slice %235 {offsets = [0, 96], sizes = [8, 32], strides = [1, 1]} : vector<8x128xf32> to vector<8x32xf32>
    %244 = arith.mulf %237, %203 : vector<8x32xf32>
    %245 = arith.mulf %236, %242 : vector<8x32xf32>
    %246 = arith.addf %244, %245 : vector<8x32xf32>
    %247 = math.tanh %246 : vector<8x32xf32>
    %248 = arith.mulf %243, %247 : vector<8x32xf32>
    %249 = tpu.concatenate %248, %227 in 1 : vector<8x32xf32>, vector<8x32xf32> -> vector<8x64xf32>
    %cst_59 = arith.constant dense<0.000000e+00> : vector<8x128xf32>
    %250 = tpu.matmul %249, %1, %cst_59 {dimension_numbers = #tpu.dot_dimension_numbers<[1], [0], [0], [1], [0, 0, 1, 1], [], []>} : vector<8x64xf32>, vector<64x128xf32>, vector<8x128xf32> -> vector<8x128xf32>
    %251 = vector.broadcast %2 : vector<1x128xf32> to vector<8x128xf32>
    %252 = arith.addf %250, %251 : vector<8x128xf32>
    %253 = arith.negf %252 : vector<8x128xf32>
    %254 = math.exp %253 : vector<8x128xf32>
    %cst_60 = arith.constant 1.000000e+00 : f32
    %255 = vector.broadcast %cst_60 : f32 to vector<8x128xf32>
    %256 = arith.addf %255, %254 : vector<8x128xf32>
    %257 = arith.divf %255, %256 : vector<8x128xf32>
    %258 = vector.extract_strided_slice %257 {offsets = [0, 0], sizes = [8, 32], strides = [1, 1]} : vector<8x128xf32> to vector<8x32xf32>
    %259 = vector.extract_strided_slice %257 {offsets = [0, 32], sizes = [8, 32], strides = [1, 1]} : vector<8x128xf32> to vector<8x32xf32>
    %260 = vector.extract_strided_slice %257 {offsets = [0, 64], sizes = [8, 32], strides = [1, 1]} : vector<8x128xf32> to vector<8x32xf32>
    %cst_61 = arith.constant 2.000000e+00 : f32
    %261 = vector.broadcast %cst_61 : f32 to vector<8x32xf32>
    %262 = arith.mulf %261, %260 : vector<8x32xf32>
    %cst_62 = arith.constant 1.000000e+00 : f32
    %263 = vector.broadcast %cst_62 : f32 to vector<8x32xf32>
    %264 = arith.subf %262, %263 : vector<8x32xf32>
    %265 = vector.extract_strided_slice %257 {offsets = [0, 96], sizes = [8, 32], strides = [1, 1]} : vector<8x128xf32> to vector<8x32xf32>
    %266 = arith.mulf %259, %225 : vector<8x32xf32>
    %267 = arith.mulf %258, %264 : vector<8x32xf32>
    %268 = arith.addf %266, %267 : vector<8x32xf32>
    %269 = math.tanh %268 : vector<8x32xf32>
    %270 = arith.mulf %265, %269 : vector<8x32xf32>
    %271 = vector.extract_strided_slice %8 {offsets = [48, 0], sizes = [8, 128], strides = [1, 1]} : vector<64x128xf32> to vector<8x128xf32>
    %cst_63 = arith.constant dense<0.000000e+00> : vector<8x128xf32>
    %272 = tpu.matmul %248, %0, %cst_63 {dimension_numbers = #tpu.dot_dimension_numbers<[1], [0], [0], [1], [0, 0, 1, 1], [], []>} : vector<8x32xf32>, vector<32x128xf32>, vector<8x128xf32> -> vector<8x128xf32>
    %273 = arith.addf %271, %272 : vector<8x128xf32>
    %274 = arith.negf %273 : vector<8x128xf32>
    %275 = math.exp %274 : vector<8x128xf32>
    %cst_64 = arith.constant 1.000000e+00 : f32
    %276 = vector.broadcast %cst_64 : f32 to vector<8x128xf32>
    %277 = arith.addf %276, %275 : vector<8x128xf32>
    %278 = arith.divf %276, %277 : vector<8x128xf32>
    %279 = vector.extract_strided_slice %278 {offsets = [0, 0], sizes = [8, 32], strides = [1, 1]} : vector<8x128xf32> to vector<8x32xf32>
    %280 = vector.extract_strided_slice %278 {offsets = [0, 32], sizes = [8, 32], strides = [1, 1]} : vector<8x128xf32> to vector<8x32xf32>
    %281 = vector.extract_strided_slice %278 {offsets = [0, 64], sizes = [8, 32], strides = [1, 1]} : vector<8x128xf32> to vector<8x32xf32>
    %cst_65 = arith.constant 2.000000e+00 : f32
    %282 = vector.broadcast %cst_65 : f32 to vector<8x32xf32>
    %283 = arith.mulf %282, %281 : vector<8x32xf32>
    %cst_66 = arith.constant 1.000000e+00 : f32
    %284 = vector.broadcast %cst_66 : f32 to vector<8x32xf32>
    %285 = arith.subf %283, %284 : vector<8x32xf32>
    %286 = vector.extract_strided_slice %278 {offsets = [0, 96], sizes = [8, 32], strides = [1, 1]} : vector<8x128xf32> to vector<8x32xf32>
    %287 = arith.mulf %280, %246 : vector<8x32xf32>
    %288 = arith.mulf %279, %285 : vector<8x32xf32>
    %289 = arith.addf %287, %288 : vector<8x32xf32>
    %290 = math.tanh %289 : vector<8x32xf32>
    %291 = arith.mulf %286, %290 : vector<8x32xf32>
    %292 = tpu.concatenate %291, %270 in 1 : vector<8x32xf32>, vector<8x32xf32> -> vector<8x64xf32>
    %cst_67 = arith.constant dense<0.000000e+00> : vector<8x128xf32>
    %293 = tpu.matmul %292, %1, %cst_67 {dimension_numbers = #tpu.dot_dimension_numbers<[1], [0], [0], [1], [0, 0, 1, 1], [], []>} : vector<8x64xf32>, vector<64x128xf32>, vector<8x128xf32> -> vector<8x128xf32>
    %294 = vector.broadcast %2 : vector<1x128xf32> to vector<8x128xf32>
    %295 = arith.addf %293, %294 : vector<8x128xf32>
    %296 = arith.negf %295 : vector<8x128xf32>
    %297 = math.exp %296 : vector<8x128xf32>
    %cst_68 = arith.constant 1.000000e+00 : f32
    %298 = vector.broadcast %cst_68 : f32 to vector<8x128xf32>
    %299 = arith.addf %298, %297 : vector<8x128xf32>
    %300 = arith.divf %298, %299 : vector<8x128xf32>
    %301 = vector.extract_strided_slice %300 {offsets = [0, 0], sizes = [8, 32], strides = [1, 1]} : vector<8x128xf32> to vector<8x32xf32>
    %302 = vector.extract_strided_slice %300 {offsets = [0, 32], sizes = [8, 32], strides = [1, 1]} : vector<8x128xf32> to vector<8x32xf32>
    %303 = vector.extract_strided_slice %300 {offsets = [0, 64], sizes = [8, 32], strides = [1, 1]} : vector<8x128xf32> to vector<8x32xf32>
    %cst_69 = arith.constant 2.000000e+00 : f32
    %304 = vector.broadcast %cst_69 : f32 to vector<8x32xf32>
    %305 = arith.mulf %304, %303 : vector<8x32xf32>
    %cst_70 = arith.constant 1.000000e+00 : f32
    %306 = vector.broadcast %cst_70 : f32 to vector<8x32xf32>
    %307 = arith.subf %305, %306 : vector<8x32xf32>
    %308 = vector.extract_strided_slice %300 {offsets = [0, 96], sizes = [8, 32], strides = [1, 1]} : vector<8x128xf32> to vector<8x32xf32>
    %309 = arith.mulf %302, %268 : vector<8x32xf32>
    %310 = arith.mulf %301, %307 : vector<8x32xf32>
    %311 = arith.addf %309, %310 : vector<8x32xf32>
    %312 = math.tanh %311 : vector<8x32xf32>
    %313 = arith.mulf %308, %312 : vector<8x32xf32>
    %314 = vector.extract_strided_slice %8 {offsets = [56, 0], sizes = [8, 128], strides = [1, 1]} : vector<64x128xf32> to vector<8x128xf32>
    %cst_71 = arith.constant dense<0.000000e+00> : vector<8x128xf32>
    %315 = tpu.matmul %291, %0, %cst_71 {dimension_numbers = #tpu.dot_dimension_numbers<[1], [0], [0], [1], [0, 0, 1, 1], [], []>} : vector<8x32xf32>, vector<32x128xf32>, vector<8x128xf32> -> vector<8x128xf32>
    %316 = arith.addf %314, %315 : vector<8x128xf32>
    %317 = arith.negf %316 : vector<8x128xf32>
    %318 = math.exp %317 : vector<8x128xf32>
    %cst_72 = arith.constant 1.000000e+00 : f32
    %319 = vector.broadcast %cst_72 : f32 to vector<8x128xf32>
    %320 = arith.addf %319, %318 : vector<8x128xf32>
    %321 = arith.divf %319, %320 : vector<8x128xf32>
    %322 = vector.extract_strided_slice %321 {offsets = [0, 0], sizes = [8, 32], strides = [1, 1]} : vector<8x128xf32> to vector<8x32xf32>
    %323 = vector.extract_strided_slice %321 {offsets = [0, 32], sizes = [8, 32], strides = [1, 1]} : vector<8x128xf32> to vector<8x32xf32>
    %324 = vector.extract_strided_slice %321 {offsets = [0, 64], sizes = [8, 32], strides = [1, 1]} : vector<8x128xf32> to vector<8x32xf32>
    %cst_73 = arith.constant 2.000000e+00 : f32
    %325 = vector.broadcast %cst_73 : f32 to vector<8x32xf32>
    %326 = arith.mulf %325, %324 : vector<8x32xf32>
    %cst_74 = arith.constant 1.000000e+00 : f32
    %327 = vector.broadcast %cst_74 : f32 to vector<8x32xf32>
    %328 = arith.subf %326, %327 : vector<8x32xf32>
    %329 = vector.extract_strided_slice %321 {offsets = [0, 96], sizes = [8, 32], strides = [1, 1]} : vector<8x128xf32> to vector<8x32xf32>
    %330 = arith.mulf %323, %289 : vector<8x32xf32>
    %331 = arith.mulf %322, %328 : vector<8x32xf32>
    %332 = arith.addf %330, %331 : vector<8x32xf32>
    %333 = math.tanh %332 : vector<8x32xf32>
    %334 = arith.mulf %329, %333 : vector<8x32xf32>
    %335 = tpu.concatenate %334, %313 in 1 : vector<8x32xf32>, vector<8x32xf32> -> vector<8x64xf32>
    %cst_75 = arith.constant dense<0.000000e+00> : vector<8x128xf32>
    %336 = tpu.matmul %335, %1, %cst_75 {dimension_numbers = #tpu.dot_dimension_numbers<[1], [0], [0], [1], [0, 0, 1, 1], [], []>} : vector<8x64xf32>, vector<64x128xf32>, vector<8x128xf32> -> vector<8x128xf32>
    %337 = vector.broadcast %2 : vector<1x128xf32> to vector<8x128xf32>
    %338 = arith.addf %336, %337 : vector<8x128xf32>
    %339 = arith.negf %338 : vector<8x128xf32>
    %340 = math.exp %339 : vector<8x128xf32>
    %cst_76 = arith.constant 1.000000e+00 : f32
    %341 = vector.broadcast %cst_76 : f32 to vector<8x128xf32>
    %342 = arith.addf %341, %340 : vector<8x128xf32>
    %343 = arith.divf %341, %342 : vector<8x128xf32>
    %344 = vector.extract_strided_slice %343 {offsets = [0, 0], sizes = [8, 32], strides = [1, 1]} : vector<8x128xf32> to vector<8x32xf32>
    %345 = vector.extract_strided_slice %343 {offsets = [0, 32], sizes = [8, 32], strides = [1, 1]} : vector<8x128xf32> to vector<8x32xf32>
    %346 = vector.extract_strided_slice %343 {offsets = [0, 64], sizes = [8, 32], strides = [1, 1]} : vector<8x128xf32> to vector<8x32xf32>
    %cst_77 = arith.constant 2.000000e+00 : f32
    %347 = vector.broadcast %cst_77 : f32 to vector<8x32xf32>
    %348 = arith.mulf %347, %346 : vector<8x32xf32>
    %cst_78 = arith.constant 1.000000e+00 : f32
    %349 = vector.broadcast %cst_78 : f32 to vector<8x32xf32>
    %350 = arith.subf %348, %349 : vector<8x32xf32>
    %351 = vector.extract_strided_slice %343 {offsets = [0, 96], sizes = [8, 32], strides = [1, 1]} : vector<8x128xf32> to vector<8x32xf32>
    %352 = arith.mulf %345, %311 : vector<8x32xf32>
    %353 = arith.mulf %344, %350 : vector<8x32xf32>
    %354 = arith.addf %352, %353 : vector<8x32xf32>
    %355 = math.tanh %354 : vector<8x32xf32>
    %356 = arith.mulf %351, %355 : vector<8x32xf32>
    %c0_79 = arith.constant 0 : index
    %c0_80 = arith.constant 0 : index
    %357 = vector.load %arg6[%c0_79, %c0_80] : memref<32x128xf32, #tpu.memory_space<vmem>>, vector<32x128xf32>
    %cst_81 = arith.constant dense<0.000000e+00> : vector<8x128xf32>
    %358 = tpu.matmul %356, %357, %cst_81 {dimension_numbers = #tpu.dot_dimension_numbers<[1], [0], [0], [1], [0, 0, 1, 1], [], []>} : vector<8x32xf32>, vector<32x128xf32>, vector<8x128xf32> -> vector<8x128xf32>
    %c0_82 = arith.constant 0 : index
    %c0_83 = arith.constant 0 : index
    %359 = vector.load %arg7[%c0_82, %c0_83] : memref<1x128xf32, #tpu.memory_space<vmem>>, vector<1x128xf32>
    %360 = vector.broadcast %359 : vector<1x128xf32> to vector<8x128xf32>
    %361 = arith.addf %358, %360 : vector<8x128xf32>
    %362 = arith.mulf %361, %361 : vector<8x128xf32>
    %cst_84 = arith.constant dense<0.000000e+00> : vector<8xf32>
    %363 = vector.multi_reduction <add>, %362, %cst_84 [1] : vector<8x128xf32> to vector<8xf32>
    %364 = vector.shape_cast %363 : vector<8xf32> to vector<8x1xf32>
    %cst_85 = arith.constant 9.99999996E-13 : f32
    %365 = vector.broadcast %cst_85 : f32 to vector<8x1xf32>
    %366 = arith.addf %364, %365 : vector<8x1xf32>
    %367 = math.rsqrt %366 : vector<8x1xf32>
    %368 = vector.broadcast %367 : vector<8x1xf32> to vector<8x128xf32>
    %369 = arith.mulf %361, %368 : vector<8x128xf32>
    %c0_86 = arith.constant 0 : index
    %c0_87 = arith.constant 0 : index
    %370 = vector.load %arg8[%c0_86, %c0_87] : memref<8x128xf32, #tpu.memory_space<vmem>>, vector<8x128xf32>
    tpu.vector_store %arg8[%c0_86, %c0_87], %369 {strides = array<i32>} : memref<8x128xf32, #tpu.memory_space<vmem>>, vector<8x128xf32>,
    return
  }
}

</mosaic_0001>

<llo_original>
// kernel: tpu_custom_call.1
$region0: #{tpu_custom_call.1}
  #allocation0 [shape = 'u32[]', space=smem, size = 0x4, offset = 0x4, fixed_abs, tag = 'smem constant byte address 0x4 - core index']
  #allocation1 [shape = 'u32[144,128]{1,0:T(1,128)}', space=vmem, size = 0x12000, scoped, tag = 'internal scratch']
  %s0 = inlined_call_operand.vmem [shape: f32[64,32], index: 0, kind: input, shape index: {}]
  %s1 = inlined_call_operand.vmem [shape: f32[32,128], index: 1, kind: input, shape index: {}]
  %s2 = inlined_call_operand.hbm [shape: f32[32,128], index: 2, kind: input, shape index: {}]
  %s3 = inlined_call_operand.vmem [shape: f32[1,128], index: 3, kind: input, shape index: {}]
  %s4 = inlined_call_operand.vmem [shape: f32[64,128], index: 4, kind: input, shape index: {}]
  %s5 = inlined_call_operand.vmem [shape: f32[1,128], index: 5, kind: input, shape index: {}]
  %s6 = inlined_call_operand.hbm [shape: f32[32,128], index: 6, kind: input, shape index: {}]
  %s7 = inlined_call_operand.vmem [shape: f32[1,128], index: 7, kind: input, shape index: {}]
  %s8 = inlined_call_operand.hbm [shape: f32[8,128], index: 8, kind: output, shape index: {}]
  %s9 = sld [smem:[#allocation0]]
  $region50: #{tpu_custom_call.1} parent=0
    _
  %s11 = ssub.s32 1, %s9
  %s12 = scalar_select 0, %s11, %s9
  $region1: #{tpu_custom_call.1} parent=0
    #allocation2 [shape = 'u8[16384]{0}', space=vmem, size = 0x4000, scoped, tag = 'input window, operand 2, single buffered']
    #allocation3 [shape = 's32[1]{0}', space=sflag, size = 0x4, scoped, tag = 'scoped memory for tpu_custom_call.1']
    #allocation4 [shape = 's32[1]{0}', space=sflag, size = 0x4, scoped, tag = 'scoped memory for tpu_custom_call.1']
    #allocation5 [shape = 'u8[16384]{0}', space=vmem, size = 0x4000, scoped, tag = 'input window, operand 6, single buffered']
    #allocation6 [shape = 's32[1]{0}', space=sflag, size = 0x4, scoped, tag = 'scoped memory for tpu_custom_call.1']
    #allocation7 [shape = 'u8[4096]{0}', space=vmem, size = 0x1000, scoped, tag = 'output window, operand 0, single buffered']
    %13 = vsyncpa [#allocation3], 0
    %14 = vsyncpa [#allocation6], 0
    %15 = vsyncpa [#allocation4], 0
    // Predicated region
    $region2: #{tpu_custom_call.1} parent=1 // pred_check
      _
    $region3: #{tpu_custom_call.1} parent=1 // pred_check_branch
      %17 = sbr.rel (0) target = $region5
    $region4: #{tpu_custom_call.1} parent=1 // pred_region
      _
    $region5: #{tpu_custom_call.1} parent=1 // pred_fallthru
      _
    // Predicated region
    $region6: #{tpu_custom_call.1} parent=1 // pred_check
      _
    $region7: #{tpu_custom_call.1} parent=1 // pred_check_branch
      %19 = sbr.rel (0) target = $region9
    $region8: #{tpu_custom_call.1} parent=1 // pred_region
      _
    $region9: #{tpu_custom_call.1} parent=1 // pred_fallthru
      _
    // Predicated region
    $region10: #{tpu_custom_call.1} parent=1 // pred_check
      _
    $region11: #{tpu_custom_call.1} parent=1 // pred_check_branch
      %21 = sbr.rel (0) target = $region13
    $region12: #{tpu_custom_call.1} parent=1 // pred_region
      %s23 = ssub.s32 512, 512
      %24 = vsyncadd [#allocation3], %s23
      %s25 = sshll.u32 [#allocation2], 4
      %s26 = int_to_ptr.vmem [resolvable:$true] %s25
      %31 = dma.hbm_to_vmem [thread:$0]  %s2, 512, %s26, [#allocation3], 128, 128, 8
    $region13: #{tpu_custom_call.1} parent=1 // pred_fallthru
      _
    // Predicated region
    $region14: #{tpu_custom_call.1} parent=1 // pred_check
      _
    $region15: #{tpu_custom_call.1} parent=1 // pred_check_branch
      %33 = sbr.rel (0) target = $region17
    $region16: #{tpu_custom_call.1} parent=1 // pred_region
      _
    $region17: #{tpu_custom_call.1} parent=1 // pred_fallthru
      _
    // Predicated region
    $region18: #{tpu_custom_call.1} parent=1 // pred_check
      _
    $region19: #{tpu_custom_call.1} parent=1 // pred_check_branch
      %35 = sbr.rel (0) target = $region21
    $region20: #{tpu_custom_call.1} parent=1 // pred_region
      _
    $region21: #{tpu_custom_call.1} parent=1 // pred_fallthru
      _
    // Predicated region
    $region22: #{tpu_custom_call.1} parent=1 // pred_check
      _
    $region23: #{tpu_custom_call.1} parent=1 // pred_check_branch
      %37 = sbr.rel (0) target = $region25
    $region24: #{tpu_custom_call.1} parent=1 // pred_region
      _
    $region25: #{tpu_custom_call.1} parent=1 // pred_fallthru
      _
    // Predicated region
    $region26: #{tpu_custom_call.1} parent=1 // pred_check
      _
    $region27: #{tpu_custom_call.1} parent=1 // pred_check_branch
      %39 = sbr.rel (0) target = $region29
    $region28: #{tpu_custom_call.1} parent=1 // pred_region
      %s41 = ssub.s32 512, 512
      %42 = vsyncadd [#allocation6], %s41
      %s43 = sshll.u32 [#allocation5], 4
      %s44 = int_to_ptr.vmem [resolvable:$true] %s43
      %49 = dma.hbm_to_vmem [thread:$0]  %s6, 512, %s44, [#allocation6], 128, 128, 8
    $region29: #{tpu_custom_call.1} parent=1 // pred_fallthru
      _
    // Predicated region
    $region30: #{tpu_custom_call.1} parent=1 // pred_check
      _
    $region31: #{tpu_custom_call.1} parent=1 // pred_check_branch
      %51 = sbr.rel (0) target = $region33
    $region32: #{tpu_custom_call.1} parent=1 // pred_region
      _
    $region33: #{tpu_custom_call.1} parent=1 // pred_fallthru
      _
    // Predicated region
    $region34: #{tpu_custom_call.1} parent=1 // pred_check
      _
    $region35: #{tpu_custom_call.1} parent=1 // pred_check_branch
      %53 = sbr.rel (0) target = $region37
    $region36: #{tpu_custom_call.1} parent=1 // pred_region
      %54 = dma.done [#allocation3], 512
    $region37: #{tpu_custom_call.1} parent=1 // pred_fallthru
      _
    // Predicated region
    $region38: #{tpu_custom_call.1} parent=1 // pred_check
      _
    $region39: #{tpu_custom_call.1} parent=1 // pred_check_branch
      %56 = sbr.rel (0) target = $region41
    $region40: #{tpu_custom_call.1} parent=1 // pred_region
      %57 = dma.done [#allocation6], 512
    $region41: #{tpu_custom_call.1} parent=1 // pred_fallthru
      _
    %v58 = vld [vmem:[#allocation2] sm:$0xff]
    %v59 = vld [vmem:[#allocation2 + $0x8] sm:$0xff]
    %v60 = vld [vmem:[#allocation2 + $0x10] sm:$0xff]
    %v61 = vld [vmem:[#allocation2 + $0x18] sm:$0xff]
    %v62 = vld [vmem:[%s4] sm:$0xff]
    %v63 = vld [vmem:[%s4 + $0x8] sm:$0xff]
    %v64 = vld [vmem:[%s4 + $0x10] sm:$0xff]
    %v65 = vld [vmem:[%s4 + $0x18] sm:$0xff]
    %v66 = vld [vmem:[%s4 + $0x20] sm:$0xff]
    %v67 = vld [vmem:[%s4 + $0x28] sm:$0xff]
    %v68 = vld [vmem:[%s4 + $0x30] sm:$0xff]
    %v69 = vld [vmem:[%s4 + $0x38] sm:$0xff]
    %v70 = vld [vmem:[%s5] sm:$0x1]
    %v71 = vld [vmem:[%s0] sm:$0xff]
    %v72 = vld [vmem:[%s0 + $0x8] sm:$0xff]
    %v73 = vld [vmem:[%s0 + $0x10] sm:$0xff]
    %v74 = vld [vmem:[%s0 + $0x18] sm:$0xff]
    %v75 = vld [vmem:[%s0 + $0x20] sm:$0xff]
    %v76 = vld [vmem:[%s0 + $0x28] sm:$0xff]
    %v77 = vld [vmem:[%s0 + $0x30] sm:$0xff]
    %v78 = vld [vmem:[%s0 + $0x38] sm:$0xff]
    %v79 = vld [vmem:[%s1] sm:$0xff]
    %v80 = vld [vmem:[%s1 + $0x8] sm:$0xff]
    %v81 = vld [vmem:[%s1 + $0x10] sm:$0xff]
    %v82 = vld [vmem:[%s1 + $0x18] sm:$0xff]
    %v83 = vld [vmem:[%s3] sm:$0x1]
    %v85 = vlaneseq
    %v86 = vshrl.u32 %v85, 7
    %v87 = vsub.s32 0, %v86
    %v88 = vrot.slane %v83, %v87
    %vm90 = vcmask 261120
    %v92 = vsel %vm90, %v71, 0
    %v95 = vsel %vm90, %v72, 0
    %v98 = vsel %vm90, %v73, 0
    %v101 = vsel %vm90, %v74, 0
    %v104 = vsel %vm90, %v75, 0
    %v107 = vsel %vm90, %v76, 0
    %v110 = vsel %vm90, %v77, 0
    %v113 = vsel %vm90, %v78, 0
    %115 = vmatprep.subr.mxu0 0.0
    %116 = vmatpush1.msra.mxu0 %v79
    %117 = vmatprep.subr.mxu0 0.0
    %118 = vmatpush1.msra.mxu0 %v80
    %119 = vmatprep.subr.mxu0 0.0
    %120 = vmatpush1.msra.mxu0 %v81
    %121 = vmatprep.subr.mxu0 0.0
    %122 = vmatpush1.msra.mxu0 %v82
    %123 = vmatprep.subr.mxu0 0.0
    %124 = vmatpush1.msra.mxu0 0.0
    %125 = vmatprep.subr.mxu0 0.0
    %126 = vmatpush1.msra.mxu0 0.0
    %127 = vmatprep.subr.mxu0 0.0
    %128 = vmatpush1.msra.mxu0 0.0
    %129 = vmatprep.subr.mxu0 0.0
    %130 = vmatpush1.msra.mxu0 0.0
    %131 = vmatprep.subr.mxu0 0.0
    %132 = vmatpush1.msra.mxu0 0.0
    %133 = vmatprep.subr.mxu0 0.0
    %134 = vmatpush1.msra.mxu0 0.0
    %135 = vmatprep.subr.mxu0 0.0
    %136 = vmatpush1.msra.mxu0 0.0
    %137 = vmatprep.subr.mxu0 0.0
    %138 = vmatpush1.msra.mxu0 0.0
    %139 = vmatprep.subr.mxu0 0.0
    %140 = vmatpush1.msra.mxu0 0.0
    %141 = vmatprep.subr.mxu0 0.0
    %142 = vmatpush1.msra.mxu0 0.0
    %143 = vmatprep.subr.mxu0 0.0
    %144 = vmatpush1.msra.mxu0 0.0
    %145 = vmatprep.subr.mxu0 0.0
    %146 = vmatpush1.msra.mxu0 0.0
    %147 = vmatprep.subr.mxu0 0.0
    %148 = vmatpush1.msra.mxu0 0.0
    %149 = vmatprep.subr.mxu0 0.0
    %150 = vmatpush1.msra.mxu0 0.0
    %151 = vmatprep.subr.mxu0 0.0
    %152 = vmatpush1.msra.mxu0 0.0
    %153 = vmatprep.subr.mxu0 0.0
    %154 = vmatpush1.msra.mxu0 0.0
    %155 = vmatprep.subr.mxu0 0.0
    %156 = vmatpush1.msra.mxu0 0.0
    %157 = vmatprep.subr.mxu0 0.0
    %158 = vmatpush1.msra.mxu0 0.0
    %159 = vmatprep.subr.mxu0 0.0
    %160 = vmatpush1.msra.mxu0 0.0
    %161 = vmatprep.subr.mxu0 0.0
    %162 = vmatpush1.msra.mxu0 0.0
    %163 = vmatprep.subr.mxu0 0.0
    %164 = vmatpush1.msra.mxu0 0.0
    %165 = vmatprep.subr.mxu0 0.0
    %166 = vmatpush1.msra.mxu0 0.0
    %167 = vmatprep.subr.mxu0 0.0
    %168 = vmatpush1.msra.mxu0 0.0
    %169 = vmatprep.subr.mxu0 0.0
    %170 = vmatpush1.msra.mxu0 0.0
    %171 = vmatprep.subr.mxu0 0.0
    %172 = vmatpush1.msra.mxu0 0.0
    %173 = vmatprep.subr.mxu0 0.0
    %174 = vmatpush1.msra.mxu0 0.0
    %175 = vmatprep.subr.mxu0 0.0
    %176 = vmatpush1.msra.mxu0 0.0
    %177 = vmatprep.subr.mxu0 0.0
    %178 = vmatpush1.msra.mxu0 0.0
    %179 = vmatprep.mubr.f32.mxu0 0.0
    %180 = vmatmul.mubr.f32.gmra.mrb[0].mxu0 %v92
    %v181 = vpop.f32.mrb[0].mxu0
    %v182 = vadd.f32 %v88, %v181
    %v183 = vpop.f32.mrb[0].mxu0
    %184 = vmatprep.mubr.f32.mxu0 0.0
    %185 = vmatmul.mubr.f32.gmra.mrb[0].mxu0 %v95
    %v186 = vpop.f32.mrb[0].mxu0
    %v187 = vadd.f32 %v88, %v186
    %v188 = vpop.f32.mrb[0].mxu0
    %189 = vmatprep.mubr.f32.mxu0 0.0
    %190 = vmatmul.mubr.f32.gmra.mrb[0].mxu0 %v98
    %v191 = vpop.f32.mrb[0].mxu0
    %v192 = vadd.f32 %v88, %v191
    %v193 = vpop.f32.mrb[0].mxu0
    %194 = vmatprep.mubr.f32.mxu0 0.0
    %195 = vmatmul.mubr.f32.gmra.mrb[0].mxu0 %v101
    %v196 = vpop.f32.mrb[0].mxu0
    %v197 = vadd.f32 %v88, %v196
    %v198 = vpop.f32.mrb[0].mxu0
    %199 = vmatprep.mubr.f32.mxu0 0.0
    %200 = vmatmul.mubr.f32.gmra.mrb[0].mxu0 %v104
    %v201 = vpop.f32.mrb[0].mxu0
    %v202 = vadd.f32 %v88, %v201
    %v203 = vpop.f32.mrb[0].mxu0
    %204 = vmatprep.mubr.f32.mxu0 0.0
    %205 = vmatmul.mubr.f32.gmra.mrb[0].mxu0 %v107
    %v206 = vpop.f32.mrb[0].mxu0
    %v207 = vadd.f32 %v88, %v206
    %v208 = vpop.f32.mrb[0].mxu0
    %209 = vmatprep.mubr.f32.mxu0 0.0
    %210 = vmatmul.mubr.f32.gmra.mrb[0].mxu0 %v110
    %v211 = vpop.f32.mrb[0].mxu0
    %v212 = vadd.f32 %v88, %v211
    %v213 = vpop.f32.mrb[0].mxu0
    %214 = vmatprep.mubr.f32.mxu0 0.0
    %215 = vmatmul.mubr.f32.gmra.mrb[0].mxu0 %v113
    %v216 = vpop.f32.mrb[0].mxu0
    %v217 = vadd.f32 %v88, %v216
    %v218 = vpop.f32.mrb[0].mxu0
    %219 = vdwg.mxu0
    %v221 = vsel %vm90, 0.0, 0
    %223 = vmatprep.subr.mxu0 0.0
    %224 = vmatpush1.msra.mxu0 %v58
    %225 = vmatprep.subr.mxu0 0.0
    %226 = vmatpush1.msra.mxu0 %v59
    %227 = vmatprep.subr.mxu0 0.0
    %228 = vmatpush1.msra.mxu0 %v60
    %229 = vmatprep.subr.mxu0 0.0
    %230 = vmatpush1.msra.mxu0 %v61
    %231 = vmatprep.subr.mxu0 0.0
    %232 = vmatpush1.msra.mxu0 0.0
    %233 = vmatprep.subr.mxu0 0.0
    %234 = vmatpush1.msra.mxu0 0.0
    %235 = vmatprep.subr.mxu0 0.0
    %236 = vmatpush1.msra.mxu0 0.0
    %237 = vmatprep.subr.mxu0 0.0
    %238 = vmatpush1.msra.mxu0 0.0
    %239 = vmatprep.subr.mxu0 0.0
    %240 = vmatpush1.msra.mxu0 0.0
    %241 = vmatprep.subr.mxu0 0.0
    %242 = vmatpush1.msra.mxu0 0.0
    %243 = vmatprep.subr.mxu0 0.0
    %244 = vmatpush1.msra.mxu0 0.0
    %245 = vmatprep.subr.mxu0 0.0
    %246 = vmatpush1.msra.mxu0 0.0
    %247 = vmatprep.subr.mxu0 0.0
    %248 = vmatpush1.msra.mxu0 0.0
    %249 = vmatprep.subr.mxu0 0.0
    %250 = vmatpush1.msra.mxu0 0.0
    %251 = vmatprep.subr.mxu0 0.0
    %252 = vmatpush1.msra.mxu0 0.0
    %253 = vmatprep.subr.mxu0 0.0
    %254 = vmatpush1.msra.mxu0 0.0
    %255 = vmatprep.subr.mxu0 0.0
    %256 = vmatpush1.msra.mxu0 0.0
    %257 = vmatprep.subr.mxu0 0.0
    %258 = vmatpush1.msra.mxu0 0.0
    %259 = vmatprep.subr.mxu0 0.0
    %260 = vmatpush1.msra.mxu0 0.0
    %261 = vmatprep.subr.mxu0 0.0
    %262 = vmatpush1.msra.mxu0 0.0
    %263 = vmatprep.subr.mxu0 0.0
    %264 = vmatpush1.msra.mxu0 0.0
    %265 = vmatprep.subr.mxu0 0.0
    %266 = vmatpush1.msra.mxu0 0.0
    %267 = vmatprep.subr.mxu0 0.0
    %268 = vmatpush1.msra.mxu0 0.0
    %269 = vmatprep.subr.mxu0 0.0
    %270 = vmatpush1.msra.mxu0 0.0
    %271 = vmatprep.subr.mxu0 0.0
    %272 = vmatpush1.msra.mxu0 0.0
    %273 = vmatprep.subr.mxu0 0.0
    %274 = vmatpush1.msra.mxu0 0.0
    %275 = vmatprep.subr.mxu0 0.0
    %276 = vmatpush1.msra.mxu0 0.0
    %277 = vmatprep.subr.mxu0 0.0
    %278 = vmatpush1.msra.mxu0 0.0
    %279 = vmatprep.subr.mxu0 0.0
    %280 = vmatpush1.msra.mxu0 0.0
    %281 = vmatprep.subr.mxu0 0.0
    %282 = vmatpush1.msra.mxu0 0.0
    %283 = vmatprep.subr.mxu0 0.0
    %284 = vmatpush1.msra.mxu0 0.0
    %285 = vmatprep.subr.mxu0 0.0
    %286 = vmatpush1.msra.mxu0 0.0
    %287 = vmatprep.mubr.f32.mxu0 0.0
    %288 = vmatmul.mubr.f32.gmra.mrb[0].mxu0 %v221
    %v289 = vpop.f32.mrb[0].mxu0
    %v290 = vadd.f32 0.0, %v289
    %v291 = vpop.f32.mrb[0].mxu0
    %292 = vdwg.mxu0
    %v293 = vadd.f32 %v182, %v290
    %v294 = vxor.u32 %v293, 2147483648
    %v295 = vmul.f32 %v294, 1.442695
    %v296 = vpow.pop %v295
    %v297 = vadd.f32 %v296, 1.0
    %v298 = vrcp.pop %v297
    %v299 = vmul.f32 1.0, %v298
    %v300 = vmul.f32 %v299, 2.0
    %v301 = vsub.f32 %v300, 1.0
    %v302 = vmul.f32 %v299, 0.0
    %304 = vrot.lane.b32.xlu0 %v301, 64
    %v305 = vpop.permute.xlu0 %304
    %v307 = vmul.f32 %v299, %v305
    %309 = vrot.lane.b32.xlu0 %v307, 32
    %v310 = vpop.permute.xlu0 %309
    %v312 = vadd.f32 %v302, %v310
    %v313 = vtanh.pop %v312
    %315 = vrot.lane.b32.xlu0 %v313, 64
    %v316 = vpop.permute.xlu0 %315
    %v318 = vmul.f32 %v299, %v316
    %320 = vrot.lane.b32.xlu0 %v318, 32
    %v321 = vpop.permute.xlu0 %320
    %v323 = vsel %vm90, %v321, 0.0
    %v325 = vlaneseq
    %v326 = vshrl.u32 %v325, 7
    %v327 = vsub.s32 0, %v326
    %v328 = vrot.slane %v70, %v327
    %vm330 = vcmask 523264
    %v332 = vsel %vm330, %v323, 0
    %334 = vmatprep.subr.mxu0 0.0
    %335 = vmatpush1.msra.mxu0 %v62
    %336 = vmatprep.subr.mxu0 0.0
    %337 = vmatpush1.msra.mxu0 %v63
    %338 = vmatprep.subr.mxu0 0.0
    %339 = vmatpush1.msra.mxu0 %v64
    %340 = vmatprep.subr.mxu0 0.0
    %341 = vmatpush1.msra.mxu0 %v65
    %342 = vmatprep.subr.mxu0 0.0
    %343 = vmatpush1.msra.mxu0 %v66
    %344 = vmatprep.subr.mxu0 0.0
    %345 = vmatpush1.msra.mxu0 %v67
    %346 = vmatprep.subr.mxu0 0.0
    %347 = vmatpush1.msra.mxu0 %v68
    %348 = vmatprep.subr.mxu0 0.0
    %349 = vmatpush1.msra.mxu0 %v69
    %350 = vmatprep.subr.mxu0 0.0
    %351 = vmatpush1.msra.mxu0 0.0
    %352 = vmatprep.subr.mxu0 0.0
    %353 = vmatpush1.msra.mxu0 0.0
    %354 = vmatprep.subr.mxu0 0.0
    %355 = vmatpush1.msra.mxu0 0.0
    %356 = vmatprep.subr.mxu0 0.0
    %357 = vmatpush1.msra.mxu0 0.0
    %358 = vmatprep.subr.mxu0 0.0
    %359 = vmatpush1.msra.mxu0 0.0
    %360 = vmatprep.subr.mxu0 0.0
    %361 = vmatpush1.msra.mxu0 0.0
    %362 = vmatprep.subr.mxu0 0.0
    %363 = vmatpush1.msra.mxu0 0.0
    %364 = vmatprep.subr.mxu0 0.0
    %365 = vmatpush1.msra.mxu0 0.0
    %366 = vmatprep.subr.mxu0 0.0
    %367 = vmatpush1.msra.mxu0 0.0
    %368 = vmatprep.subr.mxu0 0.0
    %369 = vmatpush1.msra.mxu0 0.0
    %370 = vmatprep.subr.mxu0 0.0
    %371 = vmatpush1.msra.mxu0 0.0
    %372 = vmatprep.subr.mxu0 0.0
    %373 = vmatpush1.msra.mxu0 0.0
    %374 = vmatprep.subr.mxu0 0.0
    %375 = vmatpush1.msra.mxu0 0.0
    %376 = vmatprep.subr.mxu0 0.0
    %377 = vmatpush1.msra.mxu0 0.0
    %378 = vmatprep.subr.mxu0 0.0
    %379 = vmatpush1.msra.mxu0 0.0
    %380 = vmatprep.subr.mxu0 0.0
    %381 = vmatpush1.msra.mxu0 0.0
    %382 = vmatprep.subr.mxu0 0.0
    %383 = vmatpush1.msra.mxu0 0.0
    %384 = vmatprep.subr.mxu0 0.0
    %385 = vmatpush1.msra.mxu0 0.0
    %386 = vmatprep.subr.mxu0 0.0
    %387 = vmatpush1.msra.mxu0 0.0
    %388 = vmatprep.subr.mxu0 0.0
    %389 = vmatpush1.msra.mxu0 0.0
    %390 = vmatprep.subr.mxu0 0.0
    %391 = vmatpush1.msra.mxu0 0.0
    %392 = vmatprep.subr.mxu0 0.0
    %393 = vmatpush1.msra.mxu0 0.0
    %394 = vmatprep.subr.mxu0 0.0
    %395 = vmatpush1.msra.mxu0 0.0
    %396 = vmatprep.subr.mxu0 0.0
    %397 = vmatpush1.msra.mxu0 0.0
    %398 = vmatprep.mubr.f32.mxu0 0.0
    %399 = vmatmul.mubr.f32.gmra.mrb[0].mxu0 %v332
    %v400 = vpop.f32.mrb[0].mxu0
    %v401 = vadd.f32 %v328, %v400
    %v402 = vpop.f32.mrb[0].mxu0
    %403 = vdwg.mxu0
    %v404 = vxor.u32 %v401, 2147483648
    %v405 = vmul.f32 %v404, 1.442695
    %v406 = vpow.pop %v405
    %v407 = vadd.f32 %v406, 1.0
    %v408 = vrcp.pop %v407
    %v409 = vmul.f32 1.0, %v408
    %v410 = vmul.f32 %v409, 2.0
    %v411 = vsub.f32 %v410, 1.0
    %v412 = vmul.f32 %v409, 0.0
    %414 = vrot.lane.b32.xlu0 %v411, 64
    %v415 = vpop.permute.xlu0 %414
    %v417 = vmul.f32 %v409, %v415
    %419 = vrot.lane.b32.xlu0 %v417, 32
    %v420 = vpop.permute.xlu0 %419
    %v422 = vadd.f32 %v412, %v420
    %v423 = vtanh.pop %v422
    %425 = vrot.lane.b32.xlu0 %v423, 64
    %v426 = vpop.permute.xlu0 %425
    %v428 = vmul.f32 %v409, %v426
    %v429 = vsel %vm90, %v321, 0
    %431 = vmatprep.subr.mxu0 0.0
    %432 = vmatpush1.msra.mxu0 %v58
    %433 = vmatprep.subr.mxu0 0.0
    %434 = vmatpush1.msra.mxu0 %v59
    %435 = vmatprep.subr.mxu0 0.0
    %436 = vmatpush1.msra.mxu0 %v60
    %437 = vmatprep.subr.mxu0 0.0
    %438 = vmatpush1.msra.mxu0 %v61
    %439 = vmatprep.subr.mxu0 0.0
    %440 = vmatpush1.msra.mxu0 0.0
    %441 = vmatprep.subr.mxu0 0.0
    %442 = vmatpush1.msra.mxu0 0.0
    %443 = vmatprep.subr.mxu0 0.0
    %444 = vmatpush1.msra.mxu0 0.0
    %445 = vmatprep.subr.mxu0 0.0
    %446 = vmatpush1.msra.mxu0 0.0
    %447 = vmatprep.subr.mxu0 0.0
    %448 = vmatpush1.msra.mxu0 0.0
    %449 = vmatprep.subr.mxu0 0.0
    %450 = vmatpush1.msra.mxu0 0.0
    %451 = vmatprep.subr.mxu0 0.0
    %452 = vmatpush1.msra.mxu0 0.0
    %453 = vmatprep.subr.mxu0 0.0
    %454 = vmatpush1.msra.mxu0 0.0
    %455 = vmatprep.subr.mxu0 0.0
    %456 = vmatpush1.msra.mxu0 0.0
    %457 = vmatprep.subr.mxu0 0.0
    %458 = vmatpush1.msra.mxu0 0.0
    %459 = vmatprep.subr.mxu0 0.0
    %460 = vmatpush1.msra.mxu0 0.0
    %461 = vmatprep.subr.mxu0 0.0
    %462 = vmatpush1.msra.mxu0 0.0
    %463 = vmatprep.subr.mxu0 0.0
    %464 = vmatpush1.msra.mxu0 0.0
    %465 = vmatprep.subr.mxu0 0.0
    %466 = vmatpush1.msra.mxu0 0.0
    %467 = vmatprep.subr.mxu0 0.0
    %468 = vmatpush1.msra.mxu0 0.0
    %469 = vmatprep.subr.mxu0 0.0
    %470 = vmatpush1.msra.mxu0 0.0
    %471 = vmatprep.subr.mxu0 0.0
    %472 = vmatpush1.msra.mxu0 0.0
    %473 = vmatprep.subr.mxu0 0.0
    %474 = vmatpush1.msra.mxu0 0.0
    %475 = vmatprep.subr.mxu0 0.0
    %476 = vmatpush1.msra.mxu0 0.0
    %477 = vmatprep.subr.mxu0 0.0
    %478 = vmatpush1.msra.mxu0 0.0
    %479 = vmatprep.subr.mxu0 0.0
    %480 = vmatpush1.msra.mxu0 0.0
    %481 = vmatprep.subr.mxu0 0.0
    %482 = vmatpush1.msra.mxu0 0.0
    %483 = vmatprep.subr.mxu0 0.0
    %484 = vmatpush1.msra.mxu0 0.0
    %485 = vmatprep.subr.mxu0 0.0
    %486 = vmatpush1.msra.mxu0 0.0
    %487 = vmatprep.subr.mxu0 0.0
    %488 = vmatpush1.msra.mxu0 0.0
    %489 = vmatprep.subr.mxu0 0.0
    %490 = vmatpush1.msra.mxu0 0.0
    %491 = vmatprep.subr.mxu0 0.0
    %492 = vmatpush1.msra.mxu0 0.0
    %493 = vmatprep.subr.mxu0 0.0
    %494 = vmatpush1.msra.mxu0 0.0
    %495 = vmatprep.mubr.f32.mxu0 0.0
    %496 = vmatmul.mubr.f32.gmra.mrb[0].mxu0 %v429
    %v497 = vpop.f32.mrb[0].mxu0
    %v498 = vadd.f32 0.0, %v497
    %v499 = vpop.f32.mrb[0].mxu0
    %500 = vdwg.mxu0
    %v501 = vadd.f32 %v187, %v498
    %v502 = vxor.u32 %v501, 2147483648
    %v503 = vmul.f32 %v502, 1.442695
    %v504 = vpow.pop %v503
    %v505 = vadd.f32 %v504, 1.0
    %v506 = vrcp.pop %v505
    %v507 = vmul.f32 1.0, %v506
    %v508 = vmul.f32 %v507, 2.0
    %v509 = vsub.f32 %v508, 1.0
    %v510 = vmul.f32 %v507, %v312
    %512 = vrot.lane.b32.xlu0 %v509, 64
    %v513 = vpop.permute.xlu0 %512
    %v515 = vmul.f32 %v507, %v513
    %517 = vrot.lane.b32.xlu0 %v515, 32
    %v518 = vpop.permute.xlu0 %517
    %v520 = vadd.f32 %v510, %v518
    %v521 = vtanh.pop %v520
    %523 = vrot.lane.b32.xlu0 %v521, 64
    %v524 = vpop.permute.xlu0 %523
    %v526 = vmul.f32 %v507, %v524
    %528 = vrot.lane.b32.xlu0 %v526, 32
    %v529 = vpop.permute.xlu0 %528
    %532 = vrot.lane.b32.xlu0 %v428, 64
    %v533 = vpop.permute.xlu0 %532
    %v535 = vsel %vm90, %v529, %v533
    %v537 = vsel %vm330, %v535, 0
    %539 = vmatprep.subr.mxu0 0.0
    %540 = vmatpush1.msra.mxu0 %v62
    %541 = vmatprep.subr.mxu0 0.0
    %542 = vmatpush1.msra.mxu0 %v63
    %543 = vmatprep.subr.mxu0 0.0
    %544 = vmatpush1.msra.mxu0 %v64
    %545 = vmatprep.subr.mxu0 0.0
    %546 = vmatpush1.msra.mxu0 %v65
    %547 = vmatprep.subr.mxu0 0.0
    %548 = vmatpush1.msra.mxu0 %v66
    %549 = vmatprep.subr.mxu0 0.0
    %550 = vmatpush1.msra.mxu0 %v67
    %551 = vmatprep.subr.mxu0 0.0
    %552 = vmatpush1.msra.mxu0 %v68
    %553 = vmatprep.subr.mxu0 0.0
    %554 = vmatpush1.msra.mxu0 %v69
    %555 = vmatprep.subr.mxu0 0.0
    %556 = vmatpush1.msra.mxu0 0.0
    %557 = vmatprep.subr.mxu0 0.0
    %558 = vmatpush1.msra.mxu0 0.0
    %559 = vmatprep.subr.mxu0 0.0
    %560 = vmatpush1.msra.mxu0 0.0
    %561 = vmatprep.subr.mxu0 0.0
    %562 = vmatpush1.msra.mxu0 0.0
    %563 = vmatprep.subr.mxu0 0.0
    %564 = vmatpush1.msra.mxu0 0.0
    %565 = vmatprep.subr.mxu0 0.0
    %566 = vmatpush1.msra.mxu0 0.0
    %567 = vmatprep.subr.mxu0 0.0
    %568 = vmatpush1.msra.mxu0 0.0
    %569 = vmatprep.subr.mxu0 0.0
    %570 = vmatpush1.msra.mxu0 0.0
    %571 = vmatprep.subr.mxu0 0.0
    %572 = vmatpush1.msra.mxu0 0.0
    %573 = vmatprep.subr.mxu0 0.0
    %574 = vmatpush1.msra.mxu0 0.0
    %575 = vmatprep.subr.mxu0 0.0
    %576 = vmatpush1.msra.mxu0 0.0
    %577 = vmatprep.subr.mxu0 0.0
    %578 = vmatpush1.msra.mxu0 0.0
    %579 = vmatprep.subr.mxu0 0.0
    %580 = vmatpush1.msra.mxu0 0.0
    %581 = vmatprep.subr.mxu0 0.0
    %582 = vmatpush1.msra.mxu0 0.0
    %583 = vmatprep.subr.mxu0 0.0
    %584 = vmatpush1.msra.mxu0 0.0
    %585 = vmatprep.subr.mxu0 0.0
    %586 = vmatpush1.msra.mxu0 0.0
    %587 = vmatprep.subr.mxu0 0.0
    %588 = vmatpush1.msra.mxu0 0.0
    %589 = vmatprep.subr.mxu0 0.0
    %590 = vmatpush1.msra.mxu0 0.0
    %591 = vmatprep.subr.mxu0 0.0
    %592 = vmatpush1.msra.mxu0 0.0
    %593 = vmatprep.subr.mxu0 0.0
    %594 = vmatpush1.msra.mxu0 0.0
    %595 = vmatprep.subr.mxu0 0.0
    %596 = vmatpush1.msra.mxu0 0.0
    %597 = vmatprep.subr.mxu0 0.0
    %598 = vmatpush1.msra.mxu0 0.0
    %599 = vmatprep.subr.mxu0 0.0
    %600 = vmatpush1.msra.mxu0 0.0
    %601 = vmatprep.subr.mxu0 0.0
    %602 = vmatpush1.msra.mxu0 0.0
    %603 = vmatprep.mubr.f32.mxu0 0.0
    %604 = vmatmul.mubr.f32.gmra.mrb[0].mxu0 %v537
    %v605 = vpop.f32.mrb[0].mxu0
    %v606 = vadd.f32 %v328, %v605
    %v607 = vpop.f32.mrb[0].mxu0
    %608 = vdwg.mxu0
    %v609 = vxor.u32 %v606, 2147483648
    %v610 = vmul.f32 %v609, 1.442695
    %v611 = vpow.pop %v610
    %v612 = vadd.f32 %v611, 1.0
    %v613 = vrcp.pop %v612
    %v614 = vmul.f32 1.0, %v613
    %v615 = vmul.f32 %v614, 2.0
    %v616 = vsub.f32 %v615, 1.0
    %v617 = vmul.f32 %v614, %v422
    %619 = vrot.lane.b32.xlu0 %v616, 64
    %v620 = vpop.permute.xlu0 %619
    %v622 = vmul.f32 %v614, %v620
    %624 = vrot.lane.b32.xlu0 %v622, 32
    %v625 = vpop.permute.xlu0 %624
    %v627 = vadd.f32 %v617, %v625
    %v628 = vtanh.pop %v627
    %630 = vrot.lane.b32.xlu0 %v628, 64
    %v631 = vpop.permute.xlu0 %630
    %v633 = vmul.f32 %v614, %v631
    %v634 = vsel %vm90, %v529, 0
    %636 = vmatprep.subr.mxu0 0.0
    %637 = vmatpush1.msra.mxu0 %v58
    %638 = vmatprep.subr.mxu0 0.0
    %639 = vmatpush1.msra.mxu0 %v59
    %640 = vmatprep.subr.mxu0 0.0
    %641 = vmatpush1.msra.mxu0 %v60
    %642 = vmatprep.subr.mxu0 0.0
    %643 = vmatpush1.msra.mxu0 %v61
    %644 = vmatprep.subr.mxu0 0.0
    %645 = vmatpush1.msra.mxu0 0.0
    %646 = vmatprep.subr.mxu0 0.0
    %647 = vmatpush1.msra.mxu0 0.0
    %648 = vmatprep.subr.mxu0 0.0
    %649 = vmatpush1.msra.mxu0 0.0
    %650 = vmatprep.subr.mxu0 0.0
    %651 = vmatpush1.msra.mxu0 0.0
    %652 = vmatprep.subr.mxu0 0.0
    %653 = vmatpush1.msra.mxu0 0.0
    %654 = vmatprep.subr.mxu0 0.0
    %655 = vmatpush1.msra.mxu0 0.0
    %656 = vmatprep.subr.mxu0 0.0
    %657 = vmatpush1.msra.mxu0 0.0
    %658 = vmatprep.subr.mxu0 0.0
    %659 = vmatpush1.msra.mxu0 0.0
    %660 = vmatprep.subr.mxu0 0.0
    %661 = vmatpush1.msra.mxu0 0.0
    %662 = vmatprep.subr.mxu0 0.0
    %663 = vmatpush1.msra.mxu0 0.0
    %664 = vmatprep.subr.mxu0 0.0
    %665 = vmatpush1.msra.mxu0 0.0
    %666 = vmatprep.subr.mxu0 0.0
    %667 = vmatpush1.msra.mxu0 0.0
    %668 = vmatprep.subr.mxu0 0.0
    %669 = vmatpush1.msra.mxu0 0.0
    %670 = vmatprep.subr.mxu0 0.0
    %671 = vmatpush1.msra.mxu0 0.0
    %672 = vmatprep.subr.mxu0 0.0
    %673 = vmatpush1.msra.mxu0 0.0
    %674 = vmatprep.subr.mxu0 0.0
    %675 = vmatpush1.msra.mxu0 0.0
    %676 = vmatprep.subr.mxu0 0.0
    %677 = vmatpush1.msra.mxu0 0.0
    %678 = vmatprep.subr.mxu0 0.0
    %679 = vmatpush1.msra.mxu0 0.0
    %680 = vmatprep.subr.mxu0 0.0
    %681 = vmatpush1.msra.mxu0 0.0
    %682 = vmatprep.subr.mxu0 0.0
    %683 = vmatpush1.msra.mxu0 0.0
    %684 = vmatprep.subr.mxu0 0.0
    %685 = vmatpush1.msra.mxu0 0.0
    %686 = vmatprep.subr.mxu0 0.0
    %687 = vmatpush1.msra.mxu0 0.0
    %688 = vmatprep.subr.mxu0 0.0
    %689 = vmatpush1.msra.mxu0 0.0
    %690 = vmatprep.subr.mxu0 0.0
    %691 = vmatpush1.msra.mxu0 0.0
    %692 = vmatprep.subr.mxu0 0.0
    %693 = vmatpush1.msra.mxu0 0.0
    %694 = vmatprep.subr.mxu0 0.0
    %695 = vmatpush1.msra.mxu0 0.0
    %696 = vmatprep.subr.mxu0 0.0
    %697 = vmatpush1.msra.mxu0 0.0
    %698 = vmatprep.subr.mxu0 0.0
    %699 = vmatpush1.msra.mxu0 0.0
    %700 = vmatprep.mubr.f32.mxu0 0.0
    %701 = vmatmul.mubr.f32.gmra.mrb[0].mxu0 %v634
    %v702 = vpop.f32.mrb[0].mxu0
    %v703 = vadd.f32 0.0, %v702
    %v704 = vpop.f32.mrb[0].mxu0
    %705 = vdwg.mxu0
    %v706 = vadd.f32 %v192, %v703
    %v707 = vxor.u32 %v706, 2147483648
    %v708 = vmul.f32 %v707, 1.442695
    %v709 = vpow.pop %v708
    %v710 = vadd.f32 %v709, 1.0
    %v711 = vrcp.pop %v710
    %v712 = vmul.f32 1.0, %v711
    %v713 = vmul.f32 %v712, 2.0
    %v714 = vsub.f32 %v713, 1.0
    %v715 = vmul.f32 %v712, %v520
    %717 = vrot.lane.b32.xlu0 %v714, 64
    %v718 = vpop.permute.xlu0 %717
    %v720 = vmul.f32 %v712, %v718
    %722 = vrot.lane.b32.xlu0 %v720, 32
    %v723 = vpop.permute.xlu0 %722
    %v725 = vadd.f32 %v715, %v723
    %v726 = vtanh.pop %v725
    %728 = vrot.lane.b32.xlu0 %v726, 64
    %v729 = vpop.permute.xlu0 %728
    %v731 = vmul.f32 %v712, %v729
    %733 = vrot.lane.b32.xlu0 %v731, 32
    %v734 = vpop.permute.xlu0 %733
    %737 = vrot.lane.b32.xlu0 %v633, 64
    %v738 = vpop.permute.xlu0 %737
    %v740 = vsel %vm90, %v734, %v738
    %v742 = vsel %vm330, %v740, 0
    %744 = vmatprep.subr.mxu0 0.0
    %745 = vmatpush1.msra.mxu0 %v62
    %746 = vmatprep.subr.mxu0 0.0
    %747 = vmatpush1.msra.mxu0 %v63
    %748 = vmatprep.subr.mxu0 0.0
    %749 = vmatpush1.msra.mxu0 %v64
    %750 = vmatprep.subr.mxu0 0.0
    %751 = vmatpush1.msra.mxu0 %v65
    %752 = vmatprep.subr.mxu0 0.0
    %753 = vmatpush1.msra.mxu0 %v66
    %754 = vmatprep.subr.mxu0 0.0
    %755 = vmatpush1.msra.mxu0 %v67
    %756 = vmatprep.subr.mxu0 0.0
    %757 = vmatpush1.msra.mxu0 %v68
    %758 = vmatprep.subr.mxu0 0.0
    %759 = vmatpush1.msra.mxu0 %v69
    %760 = vmatprep.subr.mxu0 0.0
    %761 = vmatpush1.msra.mxu0 0.0
    %762 = vmatprep.subr.mxu0 0.0
    %763 = vmatpush1.msra.mxu0 0.0
    %764 = vmatprep.subr.mxu0 0.0
    %765 = vmatpush1.msra.mxu0 0.0
    %766 = vmatprep.subr.mxu0 0.0
    %767 = vmatpush1.msra.mxu0 0.0
    %768 = vmatprep.subr.mxu0 0.0
    %769 = vmatpush1.msra.mxu0 0.0
    %770 = vmatprep.subr.mxu0 0.0
    %771 = vmatpush1.msra.mxu0 0.0
    %772 = vmatprep.subr.mxu0 0.0
    %773 = vmatpush1.msra.mxu0 0.0
    %774 = vmatprep.subr.mxu0 0.0
    %775 = vmatpush1.msra.mxu0 0.0
    %776 = vmatprep.subr.mxu0 0.0
    %777 = vmatpush1.msra.mxu0 0.0
    %778 = vmatprep.subr.mxu0 0.0
    %779 = vmatpush1.msra.mxu0 0.0
    %780 = vmatprep.subr.mxu0 0.0
    %781 = vmatpush1.msra.mxu0 0.0
    %782 = vmatprep.subr.mxu0 0.0
    %783 = vmatpush1.msra.mxu0 0.0
    %784 = vmatprep.subr.mxu0 0.0
    %785 = vmatpush1.msra.mxu0 0.0
    %786 = vmatprep.subr.mxu0 0.0
    %787 = vmatpush1.msra.mxu0 0.0
    %788 = vmatprep.subr.mxu0 0.0
    %789 = vmatpush1.msra.mxu0 0.0
    %790 = vmatprep.subr.mxu0 0.0
    %791 = vmatpush1.msra.mxu0 0.0
    %792 = vmatprep.subr.mxu0 0.0
    %793 = vmatpush1.msra.mxu0 0.0
    %794 = vmatprep.subr.mxu0 0.0
    %795 = vmatpush1.msra.mxu0 0.0
    %796 = vmatprep.subr.mxu0 0.0
    %797 = vmatpush1.msra.mxu0 0.0
    %798 = vmatprep.subr.mxu0 0.0
    %799 = vmatpush1.msra.mxu0 0.0
    %800 = vmatprep.subr.mxu0 0.0
    %801 = vmatpush1.msra.mxu0 0.0
    %802 = vmatprep.subr.mxu0 0.0
    %803 = vmatpush1.msra.mxu0 0.0
    %804 = vmatprep.subr.mxu0 0.0
    %805 = vmatpush1.msra.mxu0 0.0
    %806 = vmatprep.subr.mxu0 0.0
    %807 = vmatpush1.msra.mxu0 0.0
    %808 = vmatprep.mubr.f32.mxu0 0.0
    %809 = vmatmul.mubr.f32.gmra.mrb[0].mxu0 %v742
    %v810 = vpop.f32.mrb[0].mxu0
    %v811 = vadd.f32 %v328, %v810
    %v812 = vpop.f32.mrb[0].mxu0
    %813 = vdwg.mxu0
    %v814 = vxor.u32 %v811, 2147483648
    %v815 = vmul.f32 %v814, 1.442695
    %v816 = vpow.pop %v815
    %v817 = vadd.f32 %v816, 1.0
    %v818 = vrcp.pop %v817
    %v819 = vmul.f32 1.0, %v818
    %v820 = vmul.f32 %v819, 2.0
    %v821 = vsub.f32 %v820, 1.0
    %v822 = vmul.f32 %v819, %v627
    %824 = vrot.lane.b32.xlu0 %v821, 64
    %v825 = vpop.permute.xlu0 %824
    %v827 = vmul.f32 %v819, %v825
    %829 = vrot.lane.b32.xlu0 %v827, 32
    %v830 = vpop.permute.xlu0 %829
    %v832 = vadd.f32 %v822, %v830
    %v833 = vtanh.pop %v832
    %835 = vrot.lane.b32.xlu0 %v833, 64
    %v836 = vpop.permute.xlu0 %835
    %v838 = vmul.f32 %v819, %v836
    %v839 = vsel %vm90, %v734, 0
    %841 = vmatprep.subr.mxu0 0.0
    %842 = vmatpush1.msra.mxu0 %v58
    %843 = vmatprep.subr.mxu0 0.0
    %844 = vmatpush1.msra.mxu0 %v59
    %845 = vmatprep.subr.mxu0 0.0
    %846 = vmatpush1.msra.mxu0 %v60
    %847 = vmatprep.subr.mxu0 0.0
    %848 = vmatpush1.msra.mxu0 %v61
    %849 = vmatprep.subr.mxu0 0.0
    %850 = vmatpush1.msra.mxu0 0.0
    %851 = vmatprep.subr.mxu0 0.0
    %852 = vmatpush1.msra.mxu0 0.0
    %853 = vmatprep.subr.mxu0 0.0
    %854 = vmatpush1.msra.mxu0 0.0
    %855 = vmatprep.subr.mxu0 0.0
    %856 = vmatpush1.msra.mxu0 0.0
    %857 = vmatprep.subr.mxu0 0.0
    %858 = vmatpush1.msra.mxu0 0.0
    %859 = vmatprep.subr.mxu0 0.0
    %860 = vmatpush1.msra.mxu0 0.0
    %861 = vmatprep.subr.mxu0 0.0
    %862 = vmatpush1.msra.mxu0 0.0
    %863 = vmatprep.subr.mxu0 0.0
    %864 = vmatpush1.msra.mxu0 0.0
    %865 = vmatprep.subr.mxu0 0.0
    %866 = vmatpush1.msra.mxu0 0.0
    %867 = vmatprep.subr.mxu0 0.0
    %868 = vmatpush1.msra.mxu0 0.0
    %869 = vmatprep.subr.mxu0 0.0
    %870 = vmatpush1.msra.mxu0 0.0
    %871 = vmatprep.subr.mxu0 0.0
    %872 = vmatpush1.msra.mxu0 0.0
    %873 = vmatprep.subr.mxu0 0.0
    %874 = vmatpush1.msra.mxu0 0.0
    %875 = vmatprep.subr.mxu0 0.0
    %876 = vmatpush1.msra.mxu0 0.0
    %877 = vmatprep.subr.mxu0 0.0
    %878 = vmatpush1.msra.mxu0 0.0
    %879 = vmatprep.subr.mxu0 0.0
    %880 = vmatpush1.msra.mxu0 0.0
    %881 = vmatprep.subr.mxu0 0.0
    %882 = vmatpush1.msra.mxu0 0.0
    %883 = vmatprep.subr.mxu0 0.0
    %884 = vmatpush1.msra.mxu0 0.0
    %885 = vmatprep.subr.mxu0 0.0
    %886 = vmatpush1.msra.mxu0 0.0
    %887 = vmatprep.subr.mxu0 0.0
    %888 = vmatpush1.msra.mxu0 0.0
    %889 = vmatprep.subr.mxu0 0.0
    %890 = vmatpush1.msra.mxu0 0.0
    %891 = vmatprep.subr.mxu0 0.0
    %892 = vmatpush1.msra.mxu0 0.0
    %893 = vmatprep.subr.mxu0 0.0
    %894 = vmatpush1.msra.mxu0 0.0
    %895 = vmatprep.subr.mxu0 0.0
    %896 = vmatpush1.msra.mxu0 0.0
    %897 = vmatprep.subr.mxu0 0.0
    %898 = vmatpush1.msra.mxu0 0.0
    %899 = vmatprep.subr.mxu0 0.0
    %900 = vmatpush1.msra.mxu0 0.0
    %901 = vmatprep.subr.mxu0 0.0
    %902 = vmatpush1.msra.mxu0 0.0
    %903 = vmatprep.subr.mxu0 0.0
    %904 = vmatpush1.msra.mxu0 0.0
    %905 = vmatprep.mubr.f32.mxu0 0.0
    %906 = vmatmul.mubr.f32.gmra.mrb[0].mxu0 %v839
    %v907 = vpop.f32.mrb[0].mxu0
    %v908 = vadd.f32 0.0, %v907
    %v909 = vpop.f32.mrb[0].mxu0
    %910 = vdwg.mxu0
    %v911 = vadd.f32 %v197, %v908
    %v912 = vxor.u32 %v911, 2147483648
    %v913 = vmul.f32 %v912, 1.442695
    %v914 = vpow.pop %v913
    %v915 = vadd.f32 %v914, 1.0
    %v916 = vrcp.pop %v915
    %v917 = vmul.f32 1.0, %v916
    %v918 = vmul.f32 %v917, 2.0
    %v919 = vsub.f32 %v918, 1.0
    %v920 = vmul.f32 %v917, %v725
    %922 = vrot.lane.b32.xlu0 %v919, 64
    %v923 = vpop.permute.xlu0 %922
    %v925 = vmul.f32 %v917, %v923
    %927 = vrot.lane.b32.xlu0 %v925, 32
    %v928 = vpop.permute.xlu0 %927
    %v930 = vadd.f32 %v920, %v928
    %v931 = vtanh.pop %v930
    %933 = vrot.lane.b32.xlu0 %v931, 64
    %v934 = vpop.permute.xlu0 %933
    %v936 = vmul.f32 %v917, %v934
    %938 = vrot.lane.b32.xlu0 %v936, 32
    %v939 = vpop.permute.xlu0 %938
    %942 = vrot.lane.b32.xlu0 %v838, 64
    %v943 = vpop.permute.xlu0 %942
    %v945 = vsel %vm90, %v939, %v943
    %v947 = vsel %vm330, %v945, 0
    %949 = vmatprep.subr.mxu0 0.0
    %950 = vmatpush1.msra.mxu0 %v62
    %951 = vmatprep.subr.mxu0 0.0
    %952 = vmatpush1.msra.mxu0 %v63
    %953 = vmatprep.subr.mxu0 0.0
    %954 = vmatpush1.msra.mxu0 %v64
    %955 = vmatprep.subr.mxu0 0.0
    %956 = vmatpush1.msra.mxu0 %v65
    %957 = vmatprep.subr.mxu0 0.0
    %958 = vmatpush1.msra.mxu0 %v66
    %959 = vmatprep.subr.mxu0 0.0
    %960 = vmatpush1.msra.mxu0 %v67
    %961 = vmatprep.subr.mxu0 0.0
    %962 = vmatpush1.msra.mxu0 %v68
    %963 = vmatprep.subr.mxu0 0.0
    %964 = vmatpush1.msra.mxu0 %v69
    %965 = vmatprep.subr.mxu0 0.0
    %966 = vmatpush1.msra.mxu0 0.0
    %967 = vmatprep.subr.mxu0 0.0
    %968 = vmatpush1.msra.mxu0 0.0
    %969 = vmatprep.subr.mxu0 0.0
    %970 = vmatpush1.msra.mxu0 0.0
    %971 = vmatprep.subr.mxu0 0.0
    %972 = vmatpush1.msra.mxu0 0.0
    %973 = vmatprep.subr.mxu0 0.0
    %974 = vmatpush1.msra.mxu0 0.0
    %975 = vmatprep.subr.mxu0 0.0
    %976 = vmatpush1.msra.mxu0 0.0
    %977 = vmatprep.subr.mxu0 0.0
    %978 = vmatpush1.msra.mxu0 0.0
    %979 = vmatprep.subr.mxu0 0.0
    %980 = vmatpush1.msra.mxu0 0.0
    %981 = vmatprep.subr.mxu0 0.0
    %982 = vmatpush1.msra.mxu0 0.0
    %983 = vmatprep.subr.mxu0 0.0
    %984 = vmatpush1.msra.mxu0 0.0
    %985 = vmatprep.subr.mxu0 0.0
    %986 = vmatpush1.msra.mxu0 0.0
    %987 = vmatprep.subr.mxu0 0.0
    %988 = vmatpush1.msra.mxu0 0.0
    %989 = vmatprep.subr.mxu0 0.0
    %990 = vmatpush1.msra.mxu0 0.0
    %991 = vmatprep.subr.mxu0 0.0
    %992 = vmatpush1.msra.mxu0 0.0
    %993 = vmatprep.subr.mxu0 0.0
    %994 = vmatpush1.msra.mxu0 0.0
    %995 = vmatprep.subr.mxu0 0.0
    %996 = vmatpush1.msra.mxu0 0.0
    %997 = vmatprep.subr.mxu0 0.0
    %998 = vmatpush1.msra.mxu0 0.0
    %999 = vmatprep.subr.mxu0 0.0
    %1000 = vmatpush1.msra.mxu0 0.0
    %1001 = vmatprep.subr.mxu0 0.0
    %1002 = vmatpush1.msra.mxu0 0.0
    %1003 = vmatprep.subr.mxu0 0.0
    %1004 = vmatpush1.msra.mxu0 0.0
    %1005 = vmatprep.subr.mxu0 0.0
    %1006 = vmatpush1.msra.mxu0 0.0
    %1007 = vmatprep.subr.mxu0 0.0
    %1008 = vmatpush1.msra.mxu0 0.0
    %1009 = vmatprep.subr.mxu0 0.0
    %1010 = vmatpush1.msra.mxu0 0.0
    %1011 = vmatprep.subr.mxu0 0.0
    %1012 = vmatpush1.msra.mxu0 0.0
    %1013 = vmatprep.mubr.f32.mxu0 0.0
    %1014 = vmatmul.mubr.f32.gmra.mrb[0].mxu0 %v947
    %v1015 = vpop.f32.mrb[0].mxu0
    %v1016 = vadd.f32 %v328, %v1015
    %v1017 = vpop.f32.mrb[0].mxu0
    %1018 = vdwg.mxu0
    %v1019 = vxor.u32 %v1016, 2147483648
    %v1020 = vmul.f32 %v1019, 1.442695
    %v1021 = vpow.pop %v1020
    %v1022 = vadd.f32 %v1021, 1.0
    %v1023 = vrcp.pop %v1022
    %v1024 = vmul.f32 1.0, %v1023
    %v1025 = vmul.f32 %v1024, 2.0
    %v1026 = vsub.f32 %v1025, 1.0
    %v1027 = vmul.f32 %v1024, %v832
    %1029 = vrot.lane.b32.xlu0 %v1026, 64
    %v1030 = vpop.permute.xlu0 %1029
    %v1032 = vmul.f32 %v1024, %v1030
    %1034 = vrot.lane.b32.xlu0 %v1032, 32
    %v1035 = vpop.permute.xlu0 %1034
    %v1037 = vadd.f32 %v1027, %v1035
    %v1038 = vtanh.pop %v1037
    %1040 = vrot.lane.b32.xlu0 %v1038, 64
    %v1041 = vpop.permute.xlu0 %1040
    %v1043 = vmul.f32 %v1024, %v1041
    %v1044 = vsel %vm90, %v939, 0
    %1046 = vmatprep.subr.mxu0 0.0
    %1047 = vmatpush1.msra.mxu0 %v58
    %1048 = vmatprep.subr.mxu0 0.0
    %1049 = vmatpush1.msra.mxu0 %v59
    %1050 = vmatprep.subr.mxu0 0.0
    %1051 = vmatpush1.msra.mxu0 %v60
    %1052 = vmatprep.subr.mxu0 0.0
    %1053 = vmatpush1.msra.mxu0 %v61
    %1054 = vmatprep.subr.mxu0 0.0
    %1055 = vmatpush1.msra.mxu0 0.0
    %1056 = vmatprep.subr.mxu0 0.0
    %1057 = vmatpush1.msra.mxu0 0.0
    %1058 = vmatprep.subr.mxu0 0.0
    %1059 = vmatpush1.msra.mxu0 0.0
    %1060 = vmatprep.subr.mxu0 0.0
    %1061 = vmatpush1.msra.mxu0 0.0
    %1062 = vmatprep.subr.mxu0 0.0
    %1063 = vmatpush1.msra.mxu0 0.0
    %1064 = vmatprep.subr.mxu0 0.0
    %1065 = vmatpush1.msra.mxu0 0.0
    %1066 = vmatprep.subr.mxu0 0.0
    %1067 = vmatpush1.msra.mxu0 0.0
    %1068 = vmatprep.subr.mxu0 0.0
    %1069 = vmatpush1.msra.mxu0 0.0
    %1070 = vmatprep.subr.mxu0 0.0
    %1071 = vmatpush1.msra.mxu0 0.0
    %1072 = vmatprep.subr.mxu0 0.0
    %1073 = vmatpush1.msra.mxu0 0.0
    %1074 = vmatprep.subr.mxu0 0.0
    %1075 = vmatpush1.msra.mxu0 0.0
    %1076 = vmatprep.subr.mxu0 0.0
    %1077 = vmatpush1.msra.mxu0 0.0
    %1078 = vmatprep.subr.mxu0 0.0
    %1079 = vmatpush1.msra.mxu0 0.0
    %1080 = vmatprep.subr.mxu0 0.0
    %1081 = vmatpush1.msra.mxu0 0.0
    %1082 = vmatprep.subr.mxu0 0.0
    %1083 = vmatpush1.msra.mxu0 0.0
    %1084 = vmatprep.subr.mxu0 0.0
    %1085 = vmatpush1.msra.mxu0 0.0
    %1086 = vmatprep.subr.mxu0 0.0
    %1087 = vmatpush1.msra.mxu0 0.0
    %1088 = vmatprep.subr.mxu0 0.0
    %1089 = vmatpush1.msra.mxu0 0.0
    %1090 = vmatprep.subr.mxu0 0.0
    %1091 = vmatpush1.msra.mxu0 0.0
    %1092 = vmatprep.subr.mxu0 0.0
    %1093 = vmatpush1.msra.mxu0 0.0
    %1094 = vmatprep.subr.mxu0 0.0
    %1095 = vmatpush1.msra.mxu0 0.0
    %1096 = vmatprep.subr.mxu0 0.0
    %1097 = vmatpush1.msra.mxu0 0.0
    %1098 = vmatprep.subr.mxu0 0.0
    %1099 = vmatpush1.msra.mxu0 0.0
    %1100 = vmatprep.subr.mxu0 0.0
    %1101 = vmatpush1.msra.mxu0 0.0
    %1102 = vmatprep.subr.mxu0 0.0
    %1103 = vmatpush1.msra.mxu0 0.0
    %1104 = vmatprep.subr.mxu0 0.0
    %1105 = vmatpush1.msra.mxu0 0.0
    %1106 = vmatprep.subr.mxu0 0.0
    %1107 = vmatpush1.msra.mxu0 0.0
    %1108 = vmatprep.subr.mxu0 0.0
    %1109 = vmatpush1.msra.mxu0 0.0
    %1110 = vmatprep.mubr.f32.mxu0 0.0
    %1111 = vmatmul.mubr.f32.gmra.mrb[0].mxu0 %v1044
    %v1112 = vpop.f32.mrb[0].mxu0
    %v1113 = vadd.f32 0.0, %v1112
    %v1114 = vpop.f32.mrb[0].mxu0
    %1115 = vdwg.mxu0
    %v1116 = vadd.f32 %v202, %v1113
    %v1117 = vxor.u32 %v1116, 2147483648
    %v1118 = vmul.f32 %v1117, 1.442695
    %v1119 = vpow.pop %v1118
    %v1120 = vadd.f32 %v1119, 1.0
    %v1121 = vrcp.pop %v1120
    %v1122 = vmul.f32 1.0, %v1121
    %v1123 = vmul.f32 %v1122, 2.0
    %v1124 = vsub.f32 %v1123, 1.0
    %v1125 = vmul.f32 %v1122, %v930
    %1127 = vrot.lane.b32.xlu0 %v1124, 64
    %v1128 = vpop.permute.xlu0 %1127
    %v1130 = vmul.f32 %v1122, %v1128
    %1132 = vrot.lane.b32.xlu0 %v1130, 32
    %v1133 = vpop.permute.xlu0 %1132
    %v1135 = vadd.f32 %v1125, %v1133
    %v1136 = vtanh.pop %v1135
    %1138 = vrot.lane.b32.xlu0 %v1136, 64
    %v1139 = vpop.permute.xlu0 %1138
    %v1141 = vmul.f32 %v1122, %v1139
    %1143 = vrot.lane.b32.xlu0 %v1141, 32
    %v1144 = vpop.permute.xlu0 %1143
    %1147 = vrot.lane.b32.xlu0 %v1043, 64
    %v1148 = vpop.permute.xlu0 %1147
    %v1150 = vsel %vm90, %v1144, %v1148
    %v1152 = vsel %vm330, %v1150, 0
    %1154 = vmatprep.subr.mxu0 0.0
    %1155 = vmatpush1.msra.mxu0 %v62
    %1156 = vmatprep.subr.mxu0 0.0
    %1157 = vmatpush1.msra.mxu0 %v63
    %1158 = vmatprep.subr.mxu0 0.0
    %1159 = vmatpush1.msra.mxu0 %v64
    %1160 = vmatprep.subr.mxu0 0.0
    %1161 = vmatpush1.msra.mxu0 %v65
    %1162 = vmatprep.subr.mxu0 0.0
    %1163 = vmatpush1.msra.mxu0 %v66
    %1164 = vmatprep.subr.mxu0 0.0
    %1165 = vmatpush1.msra.mxu0 %v67
    %1166 = vmatprep.subr.mxu0 0.0
    %1167 = vmatpush1.msra.mxu0 %v68
    %1168 = vmatprep.subr.mxu0 0.0
    %1169 = vmatpush1.msra.mxu0 %v69
    %1170 = vmatprep.subr.mxu0 0.0
    %1171 = vmatpush1.msra.mxu0 0.0
    %1172 = vmatprep.subr.mxu0 0.0
    %1173 = vmatpush1.msra.mxu0 0.0
    %1174 = vmatprep.subr.mxu0 0.0
    %1175 = vmatpush1.msra.mxu0 0.0
    %1176 = vmatprep.subr.mxu0 0.0
    %1177 = vmatpush1.msra.mxu0 0.0
    %1178 = vmatprep.subr.mxu0 0.0
    %1179 = vmatpush1.msra.mxu0 0.0
    %1180 = vmatprep.subr.mxu0 0.0
    %1181 = vmatpush1.msra.mxu0 0.0
    %1182 = vmatprep.subr.mxu0 0.0
    %1183 = vmatpush1.msra.mxu0 0.0
    %1184 = vmatprep.subr.mxu0 0.0
    %1185 = vmatpush1.msra.mxu0 0.0
    %1186 = vmatprep.subr.mxu0 0.0
    %1187 = vmatpush1.msra.mxu0 0.0
    %1188 = vmatprep.subr.mxu0 0.0
    %1189 = vmatpush1.msra.mxu0 0.0
    %1190 = vmatprep.subr.mxu0 0.0
    %1191 = vmatpush1.msra.mxu0 0.0
    %1192 = vmatprep.subr.mxu0 0.0
    %1193 = vmatpush1.msra.mxu0 0.0
    %1194 = vmatprep.subr.mxu0 0.0
    %1195 = vmatpush1.msra.mxu0 0.0
    %1196 = vmatprep.subr.mxu0 0.0
    %1197 = vmatpush1.msra.mxu0 0.0
    %1198 = vmatprep.subr.mxu0 0.0
    %1199 = vmatpush1.msra.mxu0 0.0
    %1200 = vmatprep.subr.mxu0 0.0
    %1201 = vmatpush1.msra.mxu0 0.0
    %1202 = vmatprep.subr.mxu0 0.0
    %1203 = vmatpush1.msra.mxu0 0.0
    %1204 = vmatprep.subr.mxu0 0.0
    %1205 = vmatpush1.msra.mxu0 0.0
    %1206 = vmatprep.subr.mxu0 0.0
    %1207 = vmatpush1.msra.mxu0 0.0
    %1208 = vmatprep.subr.mxu0 0.0
    %1209 = vmatpush1.msra.mxu0 0.0
    %1210 = vmatprep.subr.mxu0 0.0
    %1211 = vmatpush1.msra.mxu0 0.0
    %1212 = vmatprep.subr.mxu0 0.0
    %1213 = vmatpush1.msra.mxu0 0.0
    %1214 = vmatprep.subr.mxu0 0.0
    %1215 = vmatpush1.msra.mxu0 0.0
    %1216 = vmatprep.subr.mxu0 0.0
    %1217 = vmatpush1.msra.mxu0 0.0
    %1218 = vmatprep.mubr.f32.mxu0 0.0
    %1219 = vmatmul.mubr.f32.gmra.mrb[0].mxu0 %v1152
    %v1220 = vpop.f32.mrb[0].mxu0
    %v1221 = vadd.f32 %v328, %v1220
    %v1222 = vpop.f32.mrb[0].mxu0
    %1223 = vdwg.mxu0
    %v1224 = vxor.u32 %v1221, 2147483648
    %v1225 = vmul.f32 %v1224, 1.442695
    %v1226 = vpow.pop %v1225
    %v1227 = vadd.f32 %v1226, 1.0
    %v1228 = vrcp.pop %v1227
    %v1229 = vmul.f32 1.0, %v1228
    %v1230 = vmul.f32 %v1229, 2.0
    %v1231 = vsub.f32 %v1230, 1.0
    %v1232 = vmul.f32 %v1229, %v1037
    %1234 = vrot.lane.b32.xlu0 %v1231, 64
    %v1235 = vpop.permute.xlu0 %1234
    %v1237 = vmul.f32 %v1229, %v1235
    %1239 = vrot.lane.b32.xlu0 %v1237, 32
    %v1240 = vpop.permute.xlu0 %1239
    %v1242 = vadd.f32 %v1232, %v1240
    %v1243 = vtanh.pop %v1242
    %1245 = vrot.lane.b32.xlu0 %v1243, 64
    %v1246 = vpop.permute.xlu0 %1245
    %v1248 = vmul.f32 %v1229, %v1246
    %v1249 = vsel %vm90, %v1144, 0
    %1251 = vmatprep.subr.mxu0 0.0
    %1252 = vmatpush1.msra.mxu0 %v58
    %1253 = vmatprep.subr.mxu0 0.0
    %1254 = vmatpush1.msra.mxu0 %v59
    %1255 = vmatprep.subr.mxu0 0.0
    %1256 = vmatpush1.msra.mxu0 %v60
    %1257 = vmatprep.subr.mxu0 0.0
    %1258 = vmatpush1.msra.mxu0 %v61
    %1259 = vmatprep.subr.mxu0 0.0
    %1260 = vmatpush1.msra.mxu0 0.0
    %1261 = vmatprep.subr.mxu0 0.0
    %1262 = vmatpush1.msra.mxu0 0.0
    %1263 = vmatprep.subr.mxu0 0.0
    %1264 = vmatpush1.msra.mxu0 0.0
    %1265 = vmatprep.subr.mxu0 0.0
    %1266 = vmatpush1.msra.mxu0 0.0
    %1267 = vmatprep.subr.mxu0 0.0
    %1268 = vmatpush1.msra.mxu0 0.0
    %1269 = vmatprep.subr.mxu0 0.0
    %1270 = vmatpush1.msra.mxu0 0.0
    %1271 = vmatprep.subr.mxu0 0.0
    %1272 = vmatpush1.msra.mxu0 0.0
    %1273 = vmatprep.subr.mxu0 0.0
    %1274 = vmatpush1.msra.mxu0 0.0
    %1275 = vmatprep.subr.mxu0 0.0
    %1276 = vmatpush1.msra.mxu0 0.0
    %1277 = vmatprep.subr.mxu0 0.0
    %1278 = vmatpush1.msra.mxu0 0.0
    %1279 = vmatprep.subr.mxu0 0.0
    %1280 = vmatpush1.msra.mxu0 0.0
    %1281 = vmatprep.subr.mxu0 0.0
    %1282 = vmatpush1.msra.mxu0 0.0
    %1283 = vmatprep.subr.mxu0 0.0
    %1284 = vmatpush1.msra.mxu0 0.0
    %1285 = vmatprep.subr.mxu0 0.0
    %1286 = vmatpush1.msra.mxu0 0.0
    %1287 = vmatprep.subr.mxu0 0.0
    %1288 = vmatpush1.msra.mxu0 0.0
    %1289 = vmatprep.subr.mxu0 0.0
    %1290 = vmatpush1.msra.mxu0 0.0
    %1291 = vmatprep.subr.mxu0 0.0
    %1292 = vmatpush1.msra.mxu0 0.0
    %1293 = vmatprep.subr.mxu0 0.0
    %1294 = vmatpush1.msra.mxu0 0.0
    %1295 = vmatprep.subr.mxu0 0.0
    %1296 = vmatpush1.msra.mxu0 0.0
    %1297 = vmatprep.subr.mxu0 0.0
    %1298 = vmatpush1.msra.mxu0 0.0
    %1299 = vmatprep.subr.mxu0 0.0
    %1300 = vmatpush1.msra.mxu0 0.0
    %1301 = vmatprep.subr.mxu0 0.0
    %1302 = vmatpush1.msra.mxu0 0.0
    %1303 = vmatprep.subr.mxu0 0.0
    %1304 = vmatpush1.msra.mxu0 0.0
    %1305 = vmatprep.subr.mxu0 0.0
    %1306 = vmatpush1.msra.mxu0 0.0
    %1307 = vmatprep.subr.mxu0 0.0
    %1308 = vmatpush1.msra.mxu0 0.0
    %1309 = vmatprep.subr.mxu0 0.0
    %1310 = vmatpush1.msra.mxu0 0.0
    %1311 = vmatprep.subr.mxu0 0.0
    %1312 = vmatpush1.msra.mxu0 0.0
    %1313 = vmatprep.subr.mxu0 0.0
    %1314 = vmatpush1.msra.mxu0 0.0
    %1315 = vmatprep.mubr.f32.mxu0 0.0
    %1316 = vmatmul.mubr.f32.gmra.mrb[0].mxu0 %v1249
    %v1317 = vpop.f32.mrb[0].mxu0
    %v1318 = vadd.f32 0.0, %v1317
    %v1319 = vpop.f32.mrb[0].mxu0
    %1320 = vdwg.mxu0
    %v1321 = vadd.f32 %v207, %v1318
    %v1322 = vxor.u32 %v1321, 2147483648
    %v1323 = vmul.f32 %v1322, 1.442695
    %v1324 = vpow.pop %v1323
    %v1325 = vadd.f32 %v1324, 1.0
    %v1326 = vrcp.pop %v1325
    %v1327 = vmul.f32 1.0, %v1326
    %v1328 = vmul.f32 %v1327, 2.0
    %v1329 = vsub.f32 %v1328, 1.0
    %v1330 = vmul.f32 %v1327, %v1135
    %1332 = vrot.lane.b32.xlu0 %v1329, 64
    %v1333 = vpop.permute.xlu0 %1332
    %v1335 = vmul.f32 %v1327, %v1333
    %1337 = vrot.lane.b32.xlu0 %v1335, 32
    %v1338 = vpop.permute.xlu0 %1337
    %v1340 = vadd.f32 %v1330, %v1338
    %v1341 = vtanh.pop %v1340
    %1343 = vrot.lane.b32.xlu0 %v1341, 64
    %v1344 = vpop.permute.xlu0 %1343
    %v1346 = vmul.f32 %v1327, %v1344
    %1348 = vrot.lane.b32.xlu0 %v1346, 32
    %v1349 = vpop.permute.xlu0 %1348
    %1352 = vrot.lane.b32.xlu0 %v1248, 64
    %v1353 = vpop.permute.xlu0 %1352
    %v1355 = vsel %vm90, %v1349, %v1353
    %v1357 = vsel %vm330, %v1355, 0
    %1359 = vmatprep.subr.mxu0 0.0
    %1360 = vmatpush1.msra.mxu0 %v62
    %1361 = vmatprep.subr.mxu0 0.0
    %1362 = vmatpush1.msra.mxu0 %v63
    %1363 = vmatprep.subr.mxu0 0.0
    %1364 = vmatpush1.msra.mxu0 %v64
    %1365 = vmatprep.subr.mxu0 0.0
    %1366 = vmatpush1.msra.mxu0 %v65
    %1367 = vmatprep.subr.mxu0 0.0
    %1368 = vmatpush1.msra.mxu0 %v66
    %1369 = vmatprep.subr.mxu0 0.0
    %1370 = vmatpush1.msra.mxu0 %v67
    %1371 = vmatprep.subr.mxu0 0.0
    %1372 = vmatpush1.msra.mxu0 %v68
    %1373 = vmatprep.subr.mxu0 0.0
    %1374 = vmatpush1.msra.mxu0 %v69
    %1375 = vmatprep.subr.mxu0 0.0
    %1376 = vmatpush1.msra.mxu0 0.0
    %1377 = vmatprep.subr.mxu0 0.0
    %1378 = vmatpush1.msra.mxu0 0.0
    %1379 = vmatprep.subr.mxu0 0.0
    %1380 = vmatpush1.msra.mxu0 0.0
    %1381 = vmatprep.subr.mxu0 0.0
    %1382 = vmatpush1.msra.mxu0 0.0
    %1383 = vmatprep.subr.mxu0 0.0
    %1384 = vmatpush1.msra.mxu0 0.0
    %1385 = vmatprep.subr.mxu0 0.0
    %1386 = vmatpush1.msra.mxu0 0.0
    %1387 = vmatprep.subr.mxu0 0.0
    %1388 = vmatpush1.msra.mxu0 0.0
    %1389 = vmatprep.subr.mxu0 0.0
    %1390 = vmatpush1.msra.mxu0 0.0
    %1391 = vmatprep.subr.mxu0 0.0
    %1392 = vmatpush1.msra.mxu0 0.0
    %1393 = vmatprep.subr.mxu0 0.0
    %1394 = vmatpush1.msra.mxu0 0.0
    %1395 = vmatprep.subr.mxu0 0.0
    %1396 = vmatpush1.msra.mxu0 0.0
    %1397 = vmatprep.subr.mxu0 0.0
    %1398 = vmatpush1.msra.mxu0 0.0
    %1399 = vmatprep.subr.mxu0 0.0
    %1400 = vmatpush1.msra.mxu0 0.0
    %1401 = vmatprep.subr.mxu0 0.0
    %1402 = vmatpush1.msra.mxu0 0.0
    %1403 = vmatprep.subr.mxu0 0.0
    %1404 = vmatpush1.msra.mxu0 0.0
    %1405 = vmatprep.subr.mxu0 0.0
    %1406 = vmatpush1.msra.mxu0 0.0
    %1407 = vmatprep.subr.mxu0 0.0
    %1408 = vmatpush1.msra.mxu0 0.0
    %1409 = vmatprep.subr.mxu0 0.0
    %1410 = vmatpush1.msra.mxu0 0.0
    %1411 = vmatprep.subr.mxu0 0.0
    %1412 = vmatpush1.msra.mxu0 0.0
    %1413 = vmatprep.subr.mxu0 0.0
    %1414 = vmatpush1.msra.mxu0 0.0
    %1415 = vmatprep.subr.mxu0 0.0
    %1416 = vmatpush1.msra.mxu0 0.0
    %1417 = vmatprep.subr.mxu0 0.0
    %1418 = vmatpush1.msra.mxu0 0.0
    %1419 = vmatprep.subr.mxu0 0.0
    %1420 = vmatpush1.msra.mxu0 0.0
    %1421 = vmatprep.subr.mxu0 0.0
    %1422 = vmatpush1.msra.mxu0 0.0
    %1423 = vmatprep.mubr.f32.mxu0 0.0
    %1424 = vmatmul.mubr.f32.gmra.mrb[0].mxu0 %v1357
    %v1425 = vpop.f32.mrb[0].mxu0
    %v1426 = vadd.f32 %v328, %v1425
    %v1427 = vpop.f32.mrb[0].mxu0
    %1428 = vdwg.mxu0
    %v1429 = vxor.u32 %v1426, 2147483648
    %v1430 = vmul.f32 %v1429, 1.442695
    %v1431 = vpow.pop %v1430
    %v1432 = vadd.f32 %v1431, 1.0
    %v1433 = vrcp.pop %v1432
    %v1434 = vmul.f32 1.0, %v1433
    %v1435 = vmul.f32 %v1434, 2.0
    %v1436 = vsub.f32 %v1435, 1.0
    %v1437 = vmul.f32 %v1434, %v1242
    %1439 = vrot.lane.b32.xlu0 %v1436, 64
    %v1440 = vpop.permute.xlu0 %1439
    %v1442 = vmul.f32 %v1434, %v1440
    %1444 = vrot.lane.b32.xlu0 %v1442, 32
    %v1445 = vpop.permute.xlu0 %1444
    %v1447 = vadd.f32 %v1437, %v1445
    %v1448 = vtanh.pop %v1447
    %1450 = vrot.lane.b32.xlu0 %v1448, 64
    %v1451 = vpop.permute.xlu0 %1450
    %v1453 = vmul.f32 %v1434, %v1451
    %v1454 = vsel %vm90, %v1349, 0
    %1456 = vmatprep.subr.mxu0 0.0
    %1457 = vmatpush1.msra.mxu0 %v58
    %1458 = vmatprep.subr.mxu0 0.0
    %1459 = vmatpush1.msra.mxu0 %v59
    %1460 = vmatprep.subr.mxu0 0.0
    %1461 = vmatpush1.msra.mxu0 %v60
    %1462 = vmatprep.subr.mxu0 0.0
    %1463 = vmatpush1.msra.mxu0 %v61
    %1464 = vmatprep.subr.mxu0 0.0
    %1465 = vmatpush1.msra.mxu0 0.0
    %1466 = vmatprep.subr.mxu0 0.0
    %1467 = vmatpush1.msra.mxu0 0.0
    %1468 = vmatprep.subr.mxu0 0.0
    %1469 = vmatpush1.msra.mxu0 0.0
    %1470 = vmatprep.subr.mxu0 0.0
    %1471 = vmatpush1.msra.mxu0 0.0
    %1472 = vmatprep.subr.mxu0 0.0
    %1473 = vmatpush1.msra.mxu0 0.0
    %1474 = vmatprep.subr.mxu0 0.0
    %1475 = vmatpush1.msra.mxu0 0.0
    %1476 = vmatprep.subr.mxu0 0.0
    %1477 = vmatpush1.msra.mxu0 0.0
    %1478 = vmatprep.subr.mxu0 0.0
    %1479 = vmatpush1.msra.mxu0 0.0
    %1480 = vmatprep.subr.mxu0 0.0
    %1481 = vmatpush1.msra.mxu0 0.0
    %1482 = vmatprep.subr.mxu0 0.0
    %1483 = vmatpush1.msra.mxu0 0.0
    %1484 = vmatprep.subr.mxu0 0.0
    %1485 = vmatpush1.msra.mxu0 0.0
    %1486 = vmatprep.subr.mxu0 0.0
    %1487 = vmatpush1.msra.mxu0 0.0
    %1488 = vmatprep.subr.mxu0 0.0
    %1489 = vmatpush1.msra.mxu0 0.0
    %1490 = vmatprep.subr.mxu0 0.0
    %1491 = vmatpush1.msra.mxu0 0.0
    %1492 = vmatprep.subr.mxu0 0.0
    %1493 = vmatpush1.msra.mxu0 0.0
    %1494 = vmatprep.subr.mxu0 0.0
    %1495 = vmatpush1.msra.mxu0 0.0
    %1496 = vmatprep.subr.mxu0 0.0
    %1497 = vmatpush1.msra.mxu0 0.0
    %1498 = vmatprep.subr.mxu0 0.0
    %1499 = vmatpush1.msra.mxu0 0.0
    %1500 = vmatprep.subr.mxu0 0.0
    %1501 = vmatpush1.msra.mxu0 0.0
    %1502 = vmatprep.subr.mxu0 0.0
    %1503 = vmatpush1.msra.mxu0 0.0
    %1504 = vmatprep.subr.mxu0 0.0
    %1505 = vmatpush1.msra.mxu0 0.0
    %1506 = vmatprep.subr.mxu0 0.0
    %1507 = vmatpush1.msra.mxu0 0.0
    %1508 = vmatprep.subr.mxu0 0.0
    %1509 = vmatpush1.msra.mxu0 0.0
    %1510 = vmatprep.subr.mxu0 0.0
    %1511 = vmatpush1.msra.mxu0 0.0
    %1512 = vmatprep.subr.mxu0 0.0
    %1513 = vmatpush1.msra.mxu0 0.0
    %1514 = vmatprep.subr.mxu0 0.0
    %1515 = vmatpush1.msra.mxu0 0.0
    %1516 = vmatprep.subr.mxu0 0.0
    %1517 = vmatpush1.msra.mxu0 0.0
    %1518 = vmatprep.subr.mxu0 0.0
    %1519 = vmatpush1.msra.mxu0 0.0
    %1520 = vmatprep.mubr.f32.mxu0 0.0
    %1521 = vmatmul.mubr.f32.gmra.mrb[0].mxu0 %v1454
    %v1522 = vpop.f32.mrb[0].mxu0
    %v1523 = vadd.f32 0.0, %v1522
    %v1524 = vpop.f32.mrb[0].mxu0
    %1525 = vdwg.mxu0
    %v1526 = vadd.f32 %v212, %v1523
    %v1527 = vxor.u32 %v1526, 2147483648
    %v1528 = vmul.f32 %v1527, 1.442695
    %v1529 = vpow.pop %v1528
    %v1530 = vadd.f32 %v1529, 1.0
    %v1531 = vrcp.pop %v1530
    %v1532 = vmul.f32 1.0, %v1531
    %v1533 = vmul.f32 %v1532, 2.0
    %v1534 = vsub.f32 %v1533, 1.0
    %v1535 = vmul.f32 %v1532, %v1340
    %1537 = vrot.lane.b32.xlu0 %v1534, 64
    %v1538 = vpop.permute.xlu0 %1537
    %v1540 = vmul.f32 %v1532, %v1538
    %1542 = vrot.lane.b32.xlu0 %v1540, 32
    %v1543 = vpop.permute.xlu0 %1542
    %v1545 = vadd.f32 %v1535, %v1543
    %v1546 = vtanh.pop %v1545
    %1548 = vrot.lane.b32.xlu0 %v1546, 64
    %v1549 = vpop.permute.xlu0 %1548
    %v1551 = vmul.f32 %v1532, %v1549
    %1553 = vrot.lane.b32.xlu0 %v1551, 32
    %v1554 = vpop.permute.xlu0 %1553
    %1557 = vrot.lane.b32.xlu0 %v1453, 64
    %v1558 = vpop.permute.xlu0 %1557
    %v1560 = vsel %vm90, %v1554, %v1558
    %v1562 = vsel %vm330, %v1560, 0
    %1564 = vmatprep.subr.mxu0 0.0
    %1565 = vmatpush1.msra.mxu0 %v62
    %1566 = vmatprep.subr.mxu0 0.0
    %1567 = vmatpush1.msra.mxu0 %v63
    %1568 = vmatprep.subr.mxu0 0.0
    %1569 = vmatpush1.msra.mxu0 %v64
    %1570 = vmatprep.subr.mxu0 0.0
    %1571 = vmatpush1.msra.mxu0 %v65
    %1572 = vmatprep.subr.mxu0 0.0
    %1573 = vmatpush1.msra.mxu0 %v66
    %1574 = vmatprep.subr.mxu0 0.0
    %1575 = vmatpush1.msra.mxu0 %v67
    %1576 = vmatprep.subr.mxu0 0.0
    %1577 = vmatpush1.msra.mxu0 %v68
    %1578 = vmatprep.subr.mxu0 0.0
    %1579 = vmatpush1.msra.mxu0 %v69
    %1580 = vmatprep.subr.mxu0 0.0
    %1581 = vmatpush1.msra.mxu0 0.0
    %1582 = vmatprep.subr.mxu0 0.0
    %1583 = vmatpush1.msra.mxu0 0.0
    %1584 = vmatprep.subr.mxu0 0.0
    %1585 = vmatpush1.msra.mxu0 0.0
    %1586 = vmatprep.subr.mxu0 0.0
    %1587 = vmatpush1.msra.mxu0 0.0
    %1588 = vmatprep.subr.mxu0 0.0
    %1589 = vmatpush1.msra.mxu0 0.0
    %1590 = vmatprep.subr.mxu0 0.0
    %1591 = vmatpush1.msra.mxu0 0.0
    %1592 = vmatprep.subr.mxu0 0.0
    %1593 = vmatpush1.msra.mxu0 0.0
    %1594 = vmatprep.subr.mxu0 0.0
    %1595 = vmatpush1.msra.mxu0 0.0
    %1596 = vmatprep.subr.mxu0 0.0
    %1597 = vmatpush1.msra.mxu0 0.0
    %1598 = vmatprep.subr.mxu0 0.0
    %1599 = vmatpush1.msra.mxu0 0.0
    %1600 = vmatprep.subr.mxu0 0.0
    %1601 = vmatpush1.msra.mxu0 0.0
    %1602 = vmatprep.subr.mxu0 0.0
    %1603 = vmatpush1.msra.mxu0 0.0
    %1604 = vmatprep.subr.mxu0 0.0
    %1605 = vmatpush1.msra.mxu0 0.0
    %1606 = vmatprep.subr.mxu0 0.0
    %1607 = vmatpush1.msra.mxu0 0.0
    %1608 = vmatprep.subr.mxu0 0.0
    %1609 = vmatpush1.msra.mxu0 0.0
    %1610 = vmatprep.subr.mxu0 0.0
    %1611 = vmatpush1.msra.mxu0 0.0
    %1612 = vmatprep.subr.mxu0 0.0
    %1613 = vmatpush1.msra.mxu0 0.0
    %1614 = vmatprep.subr.mxu0 0.0
    %1615 = vmatpush1.msra.mxu0 0.0
    %1616 = vmatprep.subr.mxu0 0.0
    %1617 = vmatpush1.msra.mxu0 0.0
    %1618 = vmatprep.subr.mxu0 0.0
    %1619 = vmatpush1.msra.mxu0 0.0
    %1620 = vmatprep.subr.mxu0 0.0
    %1621 = vmatpush1.msra.mxu0 0.0
    %1622 = vmatprep.subr.mxu0 0.0
    %1623 = vmatpush1.msra.mxu0 0.0
    %1624 = vmatprep.subr.mxu0 0.0
    %1625 = vmatpush1.msra.mxu0 0.0
    %1626 = vmatprep.subr.mxu0 0.0
    %1627 = vmatpush1.msra.mxu0 0.0
    %1628 = vmatprep.mubr.f32.mxu0 0.0
    %1629 = vmatmul.mubr.f32.gmra.mrb[0].mxu0 %v1562
    %v1630 = vpop.f32.mrb[0].mxu0
    %v1631 = vadd.f32 %v328, %v1630
    %v1632 = vpop.f32.mrb[0].mxu0
    %1633 = vdwg.mxu0
    %v1634 = vxor.u32 %v1631, 2147483648
    %v1635 = vmul.f32 %v1634, 1.442695
    %v1636 = vpow.pop %v1635
    %v1637 = vadd.f32 %v1636, 1.0
    %v1638 = vrcp.pop %v1637
    %v1639 = vmul.f32 1.0, %v1638
    %v1640 = vmul.f32 %v1639, 2.0
    %v1641 = vsub.f32 %v1640, 1.0
    %v1642 = vmul.f32 %v1639, %v1447
    %1644 = vrot.lane.b32.xlu0 %v1641, 64
    %v1645 = vpop.permute.xlu0 %1644
    %v1647 = vmul.f32 %v1639, %v1645
    %1649 = vrot.lane.b32.xlu0 %v1647, 32
    %v1650 = vpop.permute.xlu0 %1649
    %v1652 = vadd.f32 %v1642, %v1650
    %v1653 = vtanh.pop %v1652
    %1655 = vrot.lane.b32.xlu0 %v1653, 64
    %v1656 = vpop.permute.xlu0 %1655
    %v1658 = vmul.f32 %v1639, %v1656
    %v1659 = vsel %vm90, %v1554, 0
    %1661 = vmatprep.subr.mxu0 0.0
    %1662 = vmatpush1.msra.mxu0 %v58
    %1663 = vmatprep.subr.mxu0 0.0
    %1664 = vmatpush1.msra.mxu0 %v59
    %1665 = vmatprep.subr.mxu0 0.0
    %1666 = vmatpush1.msra.mxu0 %v60
    %1667 = vmatprep.subr.mxu0 0.0
    %1668 = vmatpush1.msra.mxu0 %v61
    %1669 = vmatprep.subr.mxu0 0.0
    %1670 = vmatpush1.msra.mxu0 0.0
    %1671 = vmatprep.subr.mxu0 0.0
    %1672 = vmatpush1.msra.mxu0 0.0
    %1673 = vmatprep.subr.mxu0 0.0
    %1674 = vmatpush1.msra.mxu0 0.0
    %1675 = vmatprep.subr.mxu0 0.0
    %1676 = vmatpush1.msra.mxu0 0.0
    %1677 = vmatprep.subr.mxu0 0.0
    %1678 = vmatpush1.msra.mxu0 0.0
    %1679 = vmatprep.subr.mxu0 0.0
    %1680 = vmatpush1.msra.mxu0 0.0
    %1681 = vmatprep.subr.mxu0 0.0
    %1682 = vmatpush1.msra.mxu0 0.0
    %1683 = vmatprep.subr.mxu0 0.0
    %1684 = vmatpush1.msra.mxu0 0.0
    %1685 = vmatprep.subr.mxu0 0.0
    %1686 = vmatpush1.msra.mxu0 0.0
    %1687 = vmatprep.subr.mxu0 0.0
    %1688 = vmatpush1.msra.mxu0 0.0
    %1689 = vmatprep.subr.mxu0 0.0
    %1690 = vmatpush1.msra.mxu0 0.0
    %1691 = vmatprep.subr.mxu0 0.0
    %1692 = vmatpush1.msra.mxu0 0.0
    %1693 = vmatprep.subr.mxu0 0.0
    %1694 = vmatpush1.msra.mxu0 0.0
    %1695 = vmatprep.subr.mxu0 0.0
    %1696 = vmatpush1.msra.mxu0 0.0
    %1697 = vmatprep.subr.mxu0 0.0
    %1698 = vmatpush1.msra.mxu0 0.0
    %1699 = vmatprep.subr.mxu0 0.0
    %1700 = vmatpush1.msra.mxu0 0.0
    %1701 = vmatprep.subr.mxu0 0.0
    %1702 = vmatpush1.msra.mxu0 0.0
    %1703 = vmatprep.subr.mxu0 0.0
    %1704 = vmatpush1.msra.mxu0 0.0
    %1705 = vmatprep.subr.mxu0 0.0
    %1706 = vmatpush1.msra.mxu0 0.0
    %1707 = vmatprep.subr.mxu0 0.0
    %1708 = vmatpush1.msra.mxu0 0.0
    %1709 = vmatprep.subr.mxu0 0.0
    %1710 = vmatpush1.msra.mxu0 0.0
    %1711 = vmatprep.subr.mxu0 0.0
    %1712 = vmatpush1.msra.mxu0 0.0
    %1713 = vmatprep.subr.mxu0 0.0
    %1714 = vmatpush1.msra.mxu0 0.0
    %1715 = vmatprep.subr.mxu0 0.0
    %1716 = vmatpush1.msra.mxu0 0.0
    %1717 = vmatprep.subr.mxu0 0.0
    %1718 = vmatpush1.msra.mxu0 0.0
    %1719 = vmatprep.subr.mxu0 0.0
    %1720 = vmatpush1.msra.mxu0 0.0
    %1721 = vmatprep.subr.mxu0 0.0
    %1722 = vmatpush1.msra.mxu0 0.0
    %1723 = vmatprep.subr.mxu0 0.0
    %1724 = vmatpush1.msra.mxu0 0.0
    %1725 = vmatprep.mubr.f32.mxu0 0.0
    %1726 = vmatmul.mubr.f32.gmra.mrb[0].mxu0 %v1659
    %v1727 = vpop.f32.mrb[0].mxu0
    %v1728 = vadd.f32 0.0, %v1727
    %v1729 = vpop.f32.mrb[0].mxu0
    %1730 = vdwg.mxu0
    %v1731 = vadd.f32 %v217, %v1728
    %v1732 = vxor.u32 %v1731, 2147483648
    %v1733 = vmul.f32 %v1732, 1.442695
    %v1734 = vpow.pop %v1733
    %v1735 = vadd.f32 %v1734, 1.0
    %v1736 = vrcp.pop %v1735
    %v1737 = vmul.f32 1.0, %v1736
    %v1738 = vmul.f32 %v1737, 2.0
    %v1739 = vsub.f32 %v1738, 1.0
    %v1740 = vmul.f32 %v1737, %v1545
    %1742 = vrot.lane.b32.xlu0 %v1739, 64
    %v1743 = vpop.permute.xlu0 %1742
    %v1745 = vmul.f32 %v1737, %v1743
    %1747 = vrot.lane.b32.xlu0 %v1745, 32
    %v1748 = vpop.permute.xlu0 %1747
    %v1750 = vadd.f32 %v1740, %v1748
    %v1751 = vtanh.pop %v1750
    %1753 = vrot.lane.b32.xlu0 %v1751, 64
    %v1754 = vpop.permute.xlu0 %1753
    %v1756 = vmul.f32 %v1737, %v1754
    %1758 = vrot.lane.b32.xlu0 %v1756, 32
    %v1759 = vpop.permute.xlu0 %1758
    %1762 = vrot.lane.b32.xlu0 %v1658, 64
    %v1763 = vpop.permute.xlu0 %1762
    %v1765 = vsel %vm90, %v1759, %v1763
    %v1767 = vsel %vm330, %v1765, 0
    %1769 = vmatprep.subr.mxu0 0.0
    %1770 = vmatpush1.msra.mxu0 %v62
    %1771 = vmatprep.subr.mxu0 0.0
    %1772 = vmatpush1.msra.mxu0 %v63
    %1773 = vmatprep.subr.mxu0 0.0
    %1774 = vmatpush1.msra.mxu0 %v64
    %1775 = vmatprep.subr.mxu0 0.0
    %1776 = vmatpush1.msra.mxu0 %v65
    %1777 = vmatprep.subr.mxu0 0.0
    %1778 = vmatpush1.msra.mxu0 %v66
    %1779 = vmatprep.subr.mxu0 0.0
    %1780 = vmatpush1.msra.mxu0 %v67
    %1781 = vmatprep.subr.mxu0 0.0
    %1782 = vmatpush1.msra.mxu0 %v68
    %1783 = vmatprep.subr.mxu0 0.0
    %1784 = vmatpush1.msra.mxu0 %v69
    %1785 = vmatprep.subr.mxu0 0.0
    %1786 = vmatpush1.msra.mxu0 0.0
    %1787 = vmatprep.subr.mxu0 0.0
    %1788 = vmatpush1.msra.mxu0 0.0
    %1789 = vmatprep.subr.mxu0 0.0
    %1790 = vmatpush1.msra.mxu0 0.0
    %1791 = vmatprep.subr.mxu0 0.0
    %1792 = vmatpush1.msra.mxu0 0.0
    %1793 = vmatprep.subr.mxu0 0.0
    %1794 = vmatpush1.msra.mxu0 0.0
    %1795 = vmatprep.subr.mxu0 0.0
    %1796 = vmatpush1.msra.mxu0 0.0
    %1797 = vmatprep.subr.mxu0 0.0
    %1798 = vmatpush1.msra.mxu0 0.0
    %1799 = vmatprep.subr.mxu0 0.0
    %1800 = vmatpush1.msra.mxu0 0.0
    %1801 = vmatprep.subr.mxu0 0.0
    %1802 = vmatpush1.msra.mxu0 0.0
    %1803 = vmatprep.subr.mxu0 0.0
    %1804 = vmatpush1.msra.mxu0 0.0
    %1805 = vmatprep.subr.mxu0 0.0
    %1806 = vmatpush1.msra.mxu0 0.0
    %1807 = vmatprep.subr.mxu0 0.0
    %1808 = vmatpush1.msra.mxu0 0.0
    %1809 = vmatprep.subr.mxu0 0.0
    %1810 = vmatpush1.msra.mxu0 0.0
    %1811 = vmatprep.subr.mxu0 0.0
    %1812 = vmatpush1.msra.mxu0 0.0
    %1813 = vmatprep.subr.mxu0 0.0
    %1814 = vmatpush1.msra.mxu0 0.0
    %1815 = vmatprep.subr.mxu0 0.0
    %1816 = vmatpush1.msra.mxu0 0.0
    %1817 = vmatprep.subr.mxu0 0.0
    %1818 = vmatpush1.msra.mxu0 0.0
    %1819 = vmatprep.subr.mxu0 0.0
    %1820 = vmatpush1.msra.mxu0 0.0
    %1821 = vmatprep.subr.mxu0 0.0
    %1822 = vmatpush1.msra.mxu0 0.0
    %1823 = vmatprep.subr.mxu0 0.0
    %1824 = vmatpush1.msra.mxu0 0.0
    %1825 = vmatprep.subr.mxu0 0.0
    %1826 = vmatpush1.msra.mxu0 0.0
    %1827 = vmatprep.subr.mxu0 0.0
    %1828 = vmatpush1.msra.mxu0 0.0
    %1829 = vmatprep.subr.mxu0 0.0
    %1830 = vmatpush1.msra.mxu0 0.0
    %1831 = vmatprep.subr.mxu0 0.0
    %1832 = vmatpush1.msra.mxu0 0.0
    %1833 = vmatprep.mubr.f32.mxu0 0.0
    %1834 = vmatmul.mubr.f32.gmra.mrb[0].mxu0 %v1767
    %v1835 = vpop.f32.mrb[0].mxu0
    %v1836 = vadd.f32 %v328, %v1835
    %v1837 = vpop.f32.mrb[0].mxu0
    %1838 = vdwg.mxu0
    %v1839 = vxor.u32 %v1836, 2147483648
    %v1840 = vmul.f32 %v1839, 1.442695
    %v1841 = vpow.pop %v1840
    %v1842 = vadd.f32 %v1841, 1.0
    %v1843 = vrcp.pop %v1842
    %v1844 = vmul.f32 1.0, %v1843
    %v1845 = vmul.f32 %v1844, 2.0
    %v1846 = vsub.f32 %v1845, 1.0
    %v1847 = vmul.f32 %v1844, %v1652
    %1849 = vrot.lane.b32.xlu0 %v1846, 64
    %v1850 = vpop.permute.xlu0 %1849
    %v1852 = vmul.f32 %v1844, %v1850
    %1854 = vrot.lane.b32.xlu0 %v1852, 32
    %v1855 = vpop.permute.xlu0 %1854
    %v1857 = vadd.f32 %v1847, %v1855
    %v1858 = vtanh.pop %v1857
    %1860 = vrot.lane.b32.xlu0 %v1858, 64
    %v1861 = vpop.permute.xlu0 %1860
    %v1863 = vmul.f32 %v1844, %v1861
    %v1864 = vld [vmem:[#allocation5] sm:$0xff]
    %v1865 = vld [vmem:[#allocation5 + $0x8] sm:$0xff]
    %v1866 = vld [vmem:[#allocation5 + $0x10] sm:$0xff]
    %v1867 = vld [vmem:[#allocation5 + $0x18] sm:$0xff]
    %v1868 = vld [vmem:[%s7] sm:$0x1]
    %v1870 = vlaneseq
    %v1871 = vshrl.u32 %v1870, 7
    %v1872 = vsub.s32 0, %v1871
    %v1873 = vrot.slane %v1868, %v1872
    %1876 = vrot.lane.b32.xlu0 %v1863, 32
    %v1877 = vpop.permute.xlu0 %1876
    %v1878 = vsel %vm90, %v1877, 0
    %1880 = vmatprep.subr.mxu0 0.0
    %1881 = vmatpush1.msra.mxu0 %v1864
    %1882 = vmatprep.subr.mxu0 0.0
    %1883 = vmatpush1.msra.mxu0 %v1865
    %1884 = vmatprep.subr.mxu0 0.0
    %1885 = vmatpush1.msra.mxu0 %v1866
    %1886 = vmatprep.subr.mxu0 0.0
    %1887 = vmatpush1.msra.mxu0 %v1867
    %1888 = vmatprep.subr.mxu0 0.0
    %1889 = vmatpush1.msra.mxu0 0.0
    %1890 = vmatprep.subr.mxu0 0.0
    %1891 = vmatpush1.msra.mxu0 0.0
    %1892 = vmatprep.subr.mxu0 0.0
    %1893 = vmatpush1.msra.mxu0 0.0
    %1894 = vmatprep.subr.mxu0 0.0
    %1895 = vmatpush1.msra.mxu0 0.0
    %1896 = vmatprep.subr.mxu0 0.0
    %1897 = vmatpush1.msra.mxu0 0.0
    %1898 = vmatprep.subr.mxu0 0.0
    %1899 = vmatpush1.msra.mxu0 0.0
    %1900 = vmatprep.subr.mxu0 0.0
    %1901 = vmatpush1.msra.mxu0 0.0
    %1902 = vmatprep.subr.mxu0 0.0
    %1903 = vmatpush1.msra.mxu0 0.0
    %1904 = vmatprep.subr.mxu0 0.0
    %1905 = vmatpush1.msra.mxu0 0.0
    %1906 = vmatprep.subr.mxu0 0.0
    %1907 = vmatpush1.msra.mxu0 0.0
    %1908 = vmatprep.subr.mxu0 0.0
    %1909 = vmatpush1.msra.mxu0 0.0
    %1910 = vmatprep.subr.mxu0 0.0
    %1911 = vmatpush1.msra.mxu0 0.0
    %1912 = vmatprep.subr.mxu0 0.0
    %1913 = vmatpush1.msra.mxu0 0.0
    %1914 = vmatprep.subr.mxu0 0.0
    %1915 = vmatpush1.msra.mxu0 0.0
    %1916 = vmatprep.subr.mxu0 0.0
    %1917 = vmatpush1.msra.mxu0 0.0
    %1918 = vmatprep.subr.mxu0 0.0
    %1919 = vmatpush1.msra.mxu0 0.0
    %1920 = vmatprep.subr.mxu0 0.0
    %1921 = vmatpush1.msra.mxu0 0.0
    %1922 = vmatprep.subr.mxu0 0.0
    %1923 = vmatpush1.msra.mxu0 0.0
    %1924 = vmatprep.subr.mxu0 0.0
    %1925 = vmatpush1.msra.mxu0 0.0
    %1926 = vmatprep.subr.mxu0 0.0
    %1927 = vmatpush1.msra.mxu0 0.0
    %1928 = vmatprep.subr.mxu0 0.0
    %1929 = vmatpush1.msra.mxu0 0.0
    %1930 = vmatprep.subr.mxu0 0.0
    %1931 = vmatpush1.msra.mxu0 0.0
    %1932 = vmatprep.subr.mxu0 0.0
    %1933 = vmatpush1.msra.mxu0 0.0
    %1934 = vmatprep.subr.mxu0 0.0
    %1935 = vmatpush1.msra.mxu0 0.0
    %1936 = vmatprep.subr.mxu0 0.0
    %1937 = vmatpush1.msra.mxu0 0.0
    %1938 = vmatprep.subr.mxu0 0.0
    %1939 = vmatpush1.msra.mxu0 0.0
    %1940 = vmatprep.subr.mxu0 0.0
    %1941 = vmatpush1.msra.mxu0 0.0
    %1942 = vmatprep.subr.mxu0 0.0
    %1943 = vmatpush1.msra.mxu0 0.0
    %1944 = vmatprep.mubr.f32.mxu0 0.0
    %1945 = vmatmul.mubr.f32.gmra.mrb[0].mxu0 %v1878
    %v1946 = vpop.f32.mrb[0].mxu0
    %v1947 = vadd.f32 %v1873, %v1946
    %v1948 = vpop.f32.mrb[0].mxu0
    %1949 = vdwg.mxu0
    %v1950 = vmul.f32 %v1947, %v1947
    %1951 = vadd.xlane.f32.xlu0 %v1950
    %v1952 = vpop.xlane.xlu0 %1951
    %v1953 = vadd.f32 %v1952, 1e-12
    %v1954 = vrsqrt.pop %v1953
    %v1955 = vmul.f32 %v1947, %v1954
    %1956 = vst [vmem:[#allocation7] sm:$0xff] %v1955
    // Predicated region
    $region42: #{tpu_custom_call.1} parent=1 // pred_check
      _
    $region43: #{tpu_custom_call.1} parent=1 // pred_check_branch
      %1958 = sbr.rel (0) target = $region45
    $region44: #{tpu_custom_call.1} parent=1 // pred_region
      %s1960 = ssub.s32 128, 128
      %1961 = vsyncadd [#allocation4], %s1960
      %s1963 = sshll.u32 [#allocation7], 4
      %s1964 = int_to_ptr.vmem [resolvable:$true] %s1963
      %1966 = dma.vmem_to_hbm [thread:$0]  %s1964, 128, %s8, [#allocation4]
    $region45: #{tpu_custom_call.1} parent=1 // pred_fallthru
      _
    // Predicated region
    $region46: #{tpu_custom_call.1} parent=1 // pred_check
      _
    $region47: #{tpu_custom_call.1} parent=1 // pred_check_branch
      %1968 = sbr.rel (0) target = $region49
    $region48: #{tpu_custom_call.1} parent=1 // pred_region
      %1969 = dma.done [#allocation4], 128
    $region49: #{tpu_custom_call.1} parent=1 // pred_fallthru
      _
    %1970 = vsyncpa [#allocation3], 1
    %1971 = vsyncpa [#allocation6], 1
    %1972 = vsyncpa [#allocation4], 1

</llo_original>
